<compile_context>
chip_gen: v7x
topology: tpu7x:2x2x1
jax: 0.10.0
libtpu: 0.0.40
codegen_flags: <defaults>
</compile_context>

<pallas_src>
import functools
from typing import NamedTuple

import jax
import jax.numpy as jnp
import numpy as np
from jax import lax
from jax.experimental import pallas as pl
from jax.experimental.pallas import tpu as pltpu


# ------------------------------ small helpers ------------------------------

def _round_up(x, m):
    return ((x + m - 1) // m) * m


@functools.lru_cache(maxsize=None)
def _vmem_capacity_bytes():
    try:
        return int(pltpu.get_tpu_info().vmem_capacity_bytes)
    except Exception:
        return 64 * 1024 * 1024          # conservative default (v7x per-core VMEM)


def _vmem_limit_bytes():
    # generation-aware scoped-VMEM limit: ~3/4 of physical, capped.
    return int(min(_vmem_capacity_bytes() * 3 // 4, 96 * 1024 * 1024))


def _vmem_budget_bytes():
    # working-set target for tile sizing (headroom for compiler temporaries / pipelining)
    return int(min(_vmem_capacity_bytes() // 3, 40 * 1024 * 1024))


class _Frame(NamedTuple):
    """Geometry of the flattened zero-padded spatial frame shared by all three convs."""
    d: int
    h: int
    w: int
    dp: int
    hp: int
    wp: int
    pp: int          # flattened padded spatial size
    pp_round: int    # pp rounded up to a lane multiple (128)
    halo: int        # max |flat tap offset| for a 3x3x3 kernel
    halo_r: int      # halo rounded up to 128 -> aligned window DMA starts/lengths


def _make_frame(d, h, w):
    dp, hp, wp = d + 2, h + 2, w + 2
    pp = dp * hp * wp
    pp_round = _round_up(pp, 128)
    halo = hp * wp + wp + 1
    halo_r = _round_up(halo, 128)
    return _Frame(d, h, w, dp, hp, wp, pp, pp_round, halo, halo_r)


def _interior_mask(frame):
    """(1, pp_round) f32 mask: 1.0 at valid (interior) output positions, 0 elsewhere."""
    m = jnp.ones((1, frame.d, frame.h, frame.w), jnp.float32)
    m = jnp.pad(m, ((0, 0), (1, 1), (1, 1), (1, 1)))
    m = m.reshape(1, frame.pp)
    return jnp.pad(m, ((0, 0), (0, frame.pp_round - frame.pp)))


def _flatten_to_frame(x5d, frame, dtype):
    """(N,C,D,H,W) -> (N,C,pp_round): cast FIRST (halves wrapper HBM traffic), zero-pad
    spatially by 1, flatten spatial into the lane dim, pad to a lane multiple."""
    n, c = x5d.shape[:2]
    x = x5d.astype(dtype)
    x = jnp.pad(x, ((0, 0), (0, 0), (1, 1), (1, 1), (1, 1)))
    x = x.reshape(n, c, frame.pp)
    return jnp.pad(x, ((0, 0), (0, 0), (0, frame.pp_round - frame.pp)))


def _halo_extend(x_flat, frame):
    """Add halo_r zeros on both ends of the flat spatial axis (window-DMA frame)."""
    return jnp.pad(x_flat, ((0, 0), (0, 0), (frame.halo_r, frame.halo_r)))


def _pick_conv_tile(frame, cin, cout, in_bytes, out_bytes, tile_cap=None):
    """Largest TP (multiple of 128, divides pp_round) whose per-step VMEM footprint fits."""
    budget = _vmem_budget_bytes()
    hi = frame.pp_round if tile_cap is None else min(tile_cap, frame.pp_round)
    best = 128
    for t in range(128, hi + 1, 128):
        if frame.pp_round % t:
            continue
        tpw = t + 2 * frame.halo_r
        foot = (2 * cin * tpw * in_bytes        # double-buffered halo windows
                + 27 * cin * t * in_bytes       # stacked folded-K operand
                + cout * t * 4                  # f32 matmul result
                + 2 * cout * t * out_bytes      # double-buffered output tiles
                + 2 * t * 4)                    # double-buffered mask tiles
        if foot <= budget:
            best = t
    return best


def _pick_ew_tile(frame, c, in_bytes, out_bytes):
    budget = _vmem_budget_bytes()
    best = 128
    for t in range(128, frame.pp_round + 1, 128):
        if frame.pp_round % t:
            continue
        foot = 2 * c * t * (in_bytes + out_bytes) + 2 * t * 4 + c * t * 4
        if foot <= budget:
            best = t
    return best


# ----------------------------- Pallas kernels ------------------------------

def _make_conv_kernel(offsets, tp, tpw, cin, n_pt):
    """3x3x3 conv on one flattened-spatial tile, as ONE folded-K MXU matmul.

    x_hbm   : (N, Cin, pp_round + 2*halo_r) in HBM (pl.ANY) -- manual window DMA
    w_ref   : (Cout, 27*Cin) compute dtype
    b_ref   : (Cout, 1) f32
    mask_ref: (1, TP) f32 interior mask
    o_ref   : (Cout, TP) compute dtype     (masked conv+bias)
    sum_ref : (Cout, 1) f32 per-tile sum of (conv - bias) over interior   (BN pass 1)
    sq_ref  : (Cout, 1) f32 per-tile sum of (conv - bias)^2 over interior
    scratch : win_buf (2, Cin, TPW), stacked (27*Cin, TP), sem DMA(2,)
    """

    def kernel(x_hbm, w_ref, b_ref, mask_ref, o_ref, sum_ref, sq_ref,
               win_buf, stacked, sem):
        n = pl.program_id(0)
        p = pl.program_id(1)
        num_n = pl.num_programs(0)
        t = n * n_pt + p
        total = num_n * n_pt
        slot = jnp.bitwise_and(t, 1)

        def issue(n_i, p_i, slot_i):
            start = pl.multiple_of(p_i * tp, 128)
            pltpu.make_async_copy(
                x_hbm.at[n_i, :, pl.ds(start, tpw)],
                win_buf.at[slot_i],
                sem.at[slot_i],
            ).start()

        # prime the pipeline on the very first step
        @pl.when(t == 0)
        def _prime():
            issue(n, p, 0)

        # wait for this step's halo window
        pltpu.make_async_copy(
            x_hbm.at[n, :, pl.ds(pl.multiple_of(p * tp, 128), tpw)],
            win_buf.at[slot],
            sem.at[slot],
        ).wait()

        # prefetch the next step's window into the other slot (2-deep double buffer;
        # requires strictly sequential ("arbitrary") grid execution)
        @pl.when(t + 1 < total)
        def _prefetch():
            nxt = p + 1 < n_pt
            p_next = jnp.where(nxt, p + 1, 0)
            n_next = jnp.where(nxt, n, n + 1)
            issue(n_next, p_next, 1 - slot)

        # build the (27*Cin, TP) folded-K operand from 27 statically shifted windows
        # TODO(synk): reuse one load per (kd,kh) group via pltpu.roll(+/-1) + boundary fix
        win = win_buf.at[slot]
        for ti, off in enumerate(offsets):
            stacked[ti * cin:(ti + 1) * cin, :] = win[:, off:off + tp]

        # single MXU push with K = 27*Cin (vs 27 pushes with K = Cin before)
        d = jnp.dot(w_ref[...], stacked[...], preferred_element_type=jnp.float32)

        m = mask_ref[...]                       # (1, TP), 0/1
        dm = d * m                              # bias-free conv, non-interior zeroed
        # fused BN pass-1: bias-shifted (well-conditioned) masked sums, per tile
        sum_ref[...] = jnp.sum(dm, axis=1, keepdims=True)
        sq_ref[...] = jnp.sum(dm * dm, axis=1, keepdims=True)
        # masked conv + bias -> directly usable as the next conv's zero-padded input
        o_ref[...] = (dm + b_ref[...] * m).astype(o_ref.dtype)

    return kernel


def _bn_apply_relu_kernel(x_ref, scale_ref, shift_ref, mask_ref, o_ref):
    """Fused folded-BatchNorm affine + ReLU + interior masking (keeps the zero halo)."""
    y = x_ref[...].astype(jnp.float32) * scale_ref[...] + shift_ref[...]
    o_ref[...] = (jnp.maximum(y, 0.0) * mask_ref[...]).astype(o_ref.dtype)


# ----------------------------- Pallas wrappers -----------------------------

def conv3d_frame_pallas(xe, weight, bias, mask, frame, compute_dtype, tile_cap=None):
    """3x3x3 conv (stride 1, pad 1) on a halo-extended flat frame.

    xe: (N, Cin, pp_round + 2*halo_r), compute_dtype, zero-padded frame + halo.
    Returns (y_flat (N, Cout, pp_round) compute_dtype, masked to interior,
             sum_shifted (Cout,), sumsq_shifted (Cout,))  -- stats of (conv - bias).
    """
    n_b, cin, length = xe.shape
    cout = weight.shape[0]
    assert length == frame.pp_round + 2 * frame.halo_r

    in_bytes = jnp.dtype(compute_dtype).itemsize
    tp = _pick_conv_tile(frame, cin, cout, in_bytes, in_bytes, tile_cap)
    n_pt = frame.pp_round // tp
    tpw = tp + 2 * frame.halo_r

    # (Cout, 27*Cin) folded weight matrix; row order = tap-major (kd,kh,kw), then Cin
    w_mat = jnp.transpose(weight, (0, 2, 3, 4, 1)).reshape(cout, 27 * cin)
    w_mat = w_mat.astype(compute_dtype)
    b_col = bias.reshape(cout, 1).astype(jnp.float32)

    offsets = []
    for kd in range(3):
        for kh in range(3):
            for kw in range(3):
                offsets.append(frame.halo_r + (kd - 1) * frame.hp * frame.wp
                               + (kh - 1) * frame.wp + (kw - 1))

    kernel = _make_conv_kernel(tuple(offsets), tp, tpw, cin, n_pt)

    y, s1, s2 = pl.pallas_call(
        kernel,
        out_shape=(
            jax.ShapeDtypeStruct((n_b, cout, frame.pp_round), compute_dtype),
            jax.ShapeDtypeStruct((n_b, n_pt, cout, 1), jnp.float32),
            jax.ShapeDtypeStruct((n_b, n_pt, cout, 1), jnp.float32),
        ),
        grid_spec=pltpu.PrefetchScalarGridSpec(
            num_scalar_prefetch=0,
            grid=(n_b, n_pt),
            in_specs=[
                pl.BlockSpec(memory_space=pl.ANY),                   # activations stay in HBM
                pl.BlockSpec((cout, 27 * cin), lambda n, p: (0, 0)),
                pl.BlockSpec((cout, 1), lambda n, p: (0, 0)),
                pl.BlockSpec((1, tp), lambda n, p: (0, p)),
            ],
            out_specs=(
                pl.BlockSpec((None, cout, tp), lambda n, p: (n, 0, p)),
                pl.BlockSpec((None, None, cout, 1), lambda n, p: (n, p, 0, 0)),
                pl.BlockSpec((None, None, cout, 1), lambda n, p: (n, p, 0, 0)),
            ),
            scratch_shapes=[
                pltpu.VMEM((2, cin, tpw), compute_dtype),            # double-buffered window
                pltpu.VMEM((27 * cin, tp), compute_dtype),           # folded-K operand
                pltpu.SemaphoreType.DMA((2,)),
            ],
        ),
        compiler_params=pltpu.CompilerParams(
            # "arbitrary": the cross-step window-DMA prefetch chain needs strictly
            # sequential grid execution (also sidesteps any accumulator-race concern).
            dimension_semantics=("arbitrary", "arbitrary"),
            vmem_limit_bytes=_vmem_limit_bytes(),
        ),
    )(xe, w_mat, b_col, mask)

    return y, jnp.sum(s1, axis=(0, 1))[:, 0], jnp.sum(s2, axis=(0, 1))[:, 0]


def conv3d_pallas(x, weight, bias, compute_dtype=jnp.bfloat16, tile_cap=None):
    """Convenience NCDHW -> NCDHW 3x3x3 conv (used for the structural unit check)."""
    n_b, _, d, h, w = x.shape
    cout = weight.shape[0]
    frame = _make_frame(d, h, w)
    mask = _interior_mask(frame)
    xe = _halo_extend(_flatten_to_frame(x, frame, compute_dtype), frame)
    y, _, _ = conv3d_frame_pallas(xe, weight, bias, mask, frame, compute_dtype, tile_cap)
    y = y[:, :, :frame.pp].reshape(n_b, cout, frame.dp, frame.hp, frame.wp)
    return y[:, :, 1:1 + d, 1:1 + h, 1:1 + w]


def bn_apply_relu_pallas(x_flat, scale, shift, mask, frame, out_dtype):
    """Fused per-channel affine (folded BN) + ReLU + interior masking, flat frame in/out."""
    n_b, c, _ = x_flat.shape
    tp = _pick_ew_tile(frame, c, x_flat.dtype.itemsize, jnp.dtype(out_dtype).itemsize)
    n_pt = frame.pp_round // tp
    return pl.pallas_call(
        _bn_apply_relu_kernel,
        out_shape=jax.ShapeDtypeStruct((n_b, c, frame.pp_round), out_dtype),
        grid_spec=pltpu.PrefetchScalarGridSpec(
            num_scalar_prefetch=0,
            grid=(n_b, n_pt),
            in_specs=[
                pl.BlockSpec((None, c, tp), lambda n, p: (n, 0, p)),
                pl.BlockSpec((c, 1), lambda n, p: (0, 0)),
                pl.BlockSpec((c, 1), lambda n, p: (0, 0)),
                pl.BlockSpec((1, tp), lambda n, p: (0, p)),
            ],
            out_specs=pl.BlockSpec((None, c, tp), lambda n, p: (n, 0, p)),
        ),
        compiler_params=pltpu.CompilerParams(
            dimension_semantics=("parallel", "parallel"),    # megacore-friendly (v7x)
            vmem_limit_bytes=_vmem_limit_bytes(),
        ),
    )(x_flat, scale.reshape(c, 1), shift.reshape(c, 1), mask)


def _bn_scale_shift(sum_shift, sq_shift, bias, gamma, beta, count, eps=1e-5):
    """Fold training-mode BN (batch stats, biased variance) into a per-channel affine.
    sum_shift / sq_shift are sums of (conv - bias) -> bias-shifted, well conditioned."""
    m1 = sum_shift / count
    m2 = sq_shift / count
    mean = bias + m1
    var = jnp.maximum(m2 - m1 * m1, 0.0)
    inv = lax.rsqrt(var + eps)
    scale = gamma * inv
    shift = beta - mean * scale
    return scale.astype(jnp.float32), shift.astype(jnp.float32)


# ------------------------------- JAX glue ----------------------------------

def upsample_trilinear_x2_align_corners(x):
    """x: (N, C, D, H, W) -> (N, C, 2D, 2H, 2W); trilinear, align_corners=True.
    TODO(synk): fixed-weight interleave / fusion into conv1's window construction."""
    def axis_lerp(t, axis):
        n_in = t.shape[axis]
        n_out = 2 * n_in
        if n_in == 1:
            return jnp.repeat(t, n_out, axis=axis)
        src = jnp.arange(n_out, dtype=jnp.float32) * (n_in - 1) / (n_out - 1)
        lo = jnp.clip(jnp.floor(src).astype(jnp.int32), 0, n_in - 2)
        frac = src - lo.astype(jnp.float32)
        t_lo = jnp.take(t, lo, axis=axis)
        t_hi = jnp.take(t, lo + 1, axis=axis)
        shape = [1] * t.ndim
        shape[axis] = n_out
        frac = frac.reshape(shape)
        return t_lo * (1.0 - frac) + t_hi * frac

    for ax in (2, 3, 4):
        x = axis_lerp(x, ax)
    return x


def crop(image, new_shape):
    # Matches the PyTorch helper: center-crops only dims 3 (H) and 4 (W).
    mh = image.shape[3] // 2
    mw = image.shape[4] // 2
    sh = mh - new_shape[3] // 2
    sw = mw - new_shape[4] // 2
    return image[:, :, :, sh:sh + new_shape[3], sw:sw + new_shape[4]]


# ------------------------------ Parameters ---------------------------------

def init_params(key, input_channels):
    c_half = input_channels // 2
    ks = jax.random.split(key, 6)

    def conv_init(kw_, kb_, cout, cin):
        fan_in = cin * 27
        bound = 1.0 / np.sqrt(fan_in)
        w = jax.random.uniform(kw_, (cout, cin, 3, 3, 3), jnp.float32, -bound, bound)
        b = jax.random.uniform(kb_, (cout,), jnp.float32, -bound, bound)
        return w, b

    p = {}
    p["conv1_w"], p["conv1_b"] = conv_init(ks[0], ks[1], c_half, input_channels)
    p["conv2_w"], p["conv2_b"] = conv_init(ks[2], ks[3], c_half, input_channels)
    p["conv3_w"], p["conv3_b"] = conv_init(ks[4], ks[5], c_half, c_half)
    p["bn_gamma"] = jnp.ones((c_half,), jnp.float32)
    p["bn_beta"] = jnp.zeros((c_half,), jnp.float32)
    return p


# ----------------------------- ExpandingBlock ------------------------------

def expanding_block_forward(params, x, skip_con_x, compute_dtype=jnp.bfloat16):
    """Defaults reproduced: use_bn=True, use_dropout=False. The same BatchNorm3d
    (gamma/beta) is applied twice with per-call batch stats, matching module reuse in
    training-mode forward (running-stat tracking not implemented)."""
    xu = upsample_trilinear_x2_align_corners(x)
    n_b, c, d, h, w = xu.shape
    ch = c // 2
    frame = _make_frame(d, h, w)
    mask = _interior_mask(frame)
    cnt = float(n_b * d * h * w)

    # conv1 (no BN): output stays in the flat frame with a zeroed border -> directly
    # usable as conv2's zero-padded input (no 5-D crop/pad round trips).
    xe1 = _halo_extend(_flatten_to_frame(xu, frame, compute_dtype), frame)
    y1, _, _ = conv3d_frame_pallas(xe1, params["conv1_w"], params["conv1_b"],
                                   mask, frame, compute_dtype)

    # skip connection: crop (H/W only, as in the PyTorch helper), flatten into the frame
    skip = crop(skip_con_x, (n_b, ch, d, h, w))
    skip_flat = _flatten_to_frame(skip, frame, compute_dtype)
    x2 = jnp.concatenate([y1, skip_flat], axis=1)          # (N, C, pp_round)

    # conv2 with fused BN stats, then fused BN-affine + ReLU (masked, compute dtype out)
    y2, s1, s2 = conv3d_frame_pallas(_halo_extend(x2, frame),
                                     params["conv2_w"], params["conv2_b"],
                                     mask, frame, compute_dtype)
    sc2, sh2 = _bn_scale_shift(s1, s2, params["conv2_b"], params["bn_gamma"],
                               params["bn_beta"], cnt)
    a2 = bn_apply_relu_pallas(y2, sc2, sh2, mask, frame, compute_dtype)

    # conv3 with fused BN stats (shared BN instance), final BN-affine + ReLU in f32
    y3, t1, t2 = conv3d_frame_pallas(_halo_extend(a2, frame),
                                     params["conv3_w"], params["conv3_b"],
                                     mask, frame, compute_dtype)
    sc3, sh3 = _bn_scale_shift(t1, t2, params["conv3_b"], params["bn_gamma"],
                               params["bn_beta"], cnt)
    a3 = bn_apply_relu_pallas(y3, sc3, sh3, mask, frame, jnp.float32)

    # back to NCDHW: drop the padded-frame border
    out = a3[:, :, :frame.pp].reshape(n_b, ch, frame.dp, frame.hp, frame.wp)
    return out[:, :, 1:1 + d, 1:1 + h, 1:1 + w]


# --------------------------- Pure-JAX reference ----------------------------

def _conv3d_ref(x, w, b):
    y = lax.conv_general_dilated(
        x, w, (1, 1, 1), ((1, 1), (1, 1), (1, 1)),
        dimension_numbers=("NCDHW", "OIDHW", "NCDHW"),
        precision=lax.Precision.HIGHEST)
    return y + b.reshape(1, -1, 1, 1, 1)


def _bn_relu_ref(x, g, b):
    mean = jnp.mean(x, axis=(0, 2, 3, 4), keepdims=True)
    var = jnp.mean((x - mean) ** 2, axis=(0, 2, 3, 4), keepdims=True)
    y = (x - mean) * lax.rsqrt(var + 1e-5) * g.reshape(1, -1, 1, 1, 1) + b.reshape(1, -1, 1, 1, 1)
    return jnp.maximum(y, 0.0)


def expanding_block_ref(params, x, skip_con_x):
    x = upsample_trilinear_x2_align_corners(x)
    x = _conv3d_ref(x, params["conv1_w"], params["conv1_b"])
    skip = crop(skip_con_x, x.shape)
    x = jnp.concatenate([x, skip], axis=1)
    x = _conv3d_ref(x, params["conv2_w"], params["conv2_b"])
    x = _bn_relu_ref(x, params["bn_gamma"], params["bn_beta"])
    x = _conv3d_ref(x, params["conv3_w"], params["conv3_b"])
    x = _bn_relu_ref(x, params["bn_gamma"], params["bn_beta"])
    return x


# ---------------------------------- main -----------------------------------

if __name__ == "__main__":
    key = jax.random.PRNGKey(0)
    k_p, k_x, k_s, k_iw, k_ix = jax.random.split(key, 5)

    input_channels = 4
    params = init_params(k_p, input_channels)

    # x: (N, C, D, H, W); skip has C//2 channels, same D after upsample, larger H/W.
    x = jax.random.normal(k_x, (2, input_channels, 4, 4, 4), jnp.float32)
    skip_con_x = jax.random.normal(k_s, (2, input_channels // 2, 8, 12, 12), jnp.float32)

    # --- structural check of the conv kernel: integer-valued inputs/weights make every
    #     intermediate exactly representable, so tap/halo indexing must match the XLA
    #     reference (effectively bit-exactly) independent of MXU pass precision.
    #     tile_cap=128 forces a multi-tile grid so the double-buffered window-DMA chain
    #     is exercised across both grid axes (odd spatial dims stress the padding).
    xi = jax.random.randint(k_ix, (2, 4, 5, 6, 7), -2, 3).astype(jnp.float32)
    wi = jax.random.randint(k_iw, (2, 4, 3, 3, 3), -2, 3).astype(jnp.float32)
    bi = jnp.array([1.0, -2.0], jnp.float32)
    conv_exact = jax.jit(functools.partial(conv3d_pallas, compute_dtype=jnp.float32,
                                           tile_cap=128))
    got = jax.block_until_ready(conv_exact(xi, wi, bi))
    want = _conv3d_ref(xi, wi, bi)
    np.testing.assert_allclose(np.asarray(got), np.asarray(want), rtol=0, atol=1e-5)

    ref_fn = jax.jit(expanding_block_ref)
    fwd_f32 = jax.jit(functools.partial(expanding_block_forward, compute_dtype=jnp.float32))
    fwd_bf16 = jax.jit(functools.partial(expanding_block_forward, compute_dtype=jnp.bfloat16))

    ref = jax.block_until_ready(ref_fn(params, x, skip_con_x))

    # f32 compute path: tight end-to-end check against the XLA reference
    out_f32 = jax.block_until_ready(fwd_f32(params, x, skip_con_x))
    assert out_f32.shape == (2, input_channels // 2, 8, 8, 8), out_f32.shape
    np.testing.assert_allclose(np.asarray(out_f32), np.asarray(ref), rtol=2e-3, atol=2e-3)

    # bf16 MXU operands / bf16 inter-op activations (default): looser tolerance --
    # operand/storage quantization is amplified by the two batch-norm normalizations.
    out_bf16 = jax.block_until_ready(fwd_bf16(params, x, skip_con_x))
    assert out_bf16.shape == (2, input_channels // 2, 8, 8, 8), out_bf16.shape
    np.testing.assert_allclose(np.asarray(out_bf16), np.asarray(ref), rtol=5e-2, atol=5e-2)

    print("KERNEL_OK")
</pallas_src>

<mosaic_0001>
module attributes {stable_mosaic.version = 11 : i64} {
  func.func @kernel(%arg0: i32, %arg1: i32, %arg2: memref<2x4x768xf32, #tpu.memory_space<any>>, %arg3: memref<2x108xf32, #tpu.memory_space<vmem>>, %arg4: memref<2x1xf32, #tpu.memory_space<vmem>>, %arg5: memref<1x128xf32, #tpu.memory_space<vmem>>, %arg6: memref<1x2x128xf32, #tpu.memory_space<vmem>>, %arg7: memref<1x1x2x1xf32, #tpu.memory_space<vmem>>, %arg8: memref<1x1x2x1xf32, #tpu.memory_space<vmem>>, %arg9: memref<2x4x384xf32, #tpu.memory_space<vmem>>, %arg10: memref<108x128xf32, #tpu.memory_space<vmem>>, %arg11: memref<2x!tpu.dma_semaphore, #tpu.memory_space<semaphore_mem>>) attributes {dimension_semantics = [#tpu.dimension_semantics<arbitrary>, #tpu.dimension_semantics<arbitrary>], iteration_bounds = array<i64: 2, 4>, scalar_prefetch = 0 : i64, scratch_operands = 3 : i64, tpu.core_type = #tpu.core_type<tc>, window_params = [{}, {pipeline_mode = #tpu.pipeline_mode<synchronous>, transform_indices = @transform_1, window_bounds = array<i64: 2, 108>}, {pipeline_mode = #tpu.pipeline_mode<synchronous>, transform_indices = @transform_2, window_bounds = array<i64: 2, 1>}, {transform_indices = @transform_3, window_bounds = array<i64: 1, 128>}, {transform_indices = @transform_4, window_bounds = array<i64: 1, 2, 128>}, {transform_indices = @transform_5, window_bounds = array<i64: 1, 1, 2, 1>}, {transform_indices = @transform_6, window_bounds = array<i64: 1, 1, 2, 1>}]} {
    %c4_i32 = arith.constant 4 : i32
    %0 = arith.muli %arg0, %c4_i32 : i32
    %1 = arith.addi %0, %arg1 : i32
    %c1_i32 = arith.constant 1 : i32
    %2 = arith.andi %1, %c1_i32 : i32
    %c0_i32 = arith.constant 0 : i32
    %3 = arith.cmpi eq, %1, %c0_i32 : i32
    %4 = arith.extui %3 : i1 to i32
    %c0_i32_0 = arith.constant 0 : i32
    %5 = arith.cmpi ne, %4, %c0_i32_0 : i32
    scf.if %5 {
      %c128_i32_138 = arith.constant 128 : i32
      %151 = arith.muli %arg1, %c128_i32_138 : i32
      %152 = tpu.assume_multiple %151, 128 : i32
      %c0_i32_139 = arith.constant 0 : i32
      %c0_i32_140 = arith.constant 0 : i32
      %c0_i32_141 = arith.constant 0 : i32
      %153 = tpu.memref_slice %arg2[%arg0, %c0_i32_141, %152] : memref<2x4x768xf32, #tpu.memory_space<any>> -> memref<1x4x384xf32, #tpu.memory_space<any>>
      %154 = tpu.memref_squeeze %153 : memref<1x4x384xf32, #tpu.memory_space<any>> -> memref<4x384xf32, #tpu.memory_space<any>>
      %c0_i32_142 = arith.constant 0 : i32
      %c0_i32_143 = arith.constant 0 : i32
      %155 = tpu.memref_slice %arg9[%c0_i32_139, %c0_i32_142, %c0_i32_143] : memref<2x4x384xf32, #tpu.memory_space<vmem>> -> memref<1x4x384xf32, #tpu.memory_space<vmem>>
      %156 = tpu.memref_squeeze %155 : memref<1x4x384xf32, #tpu.memory_space<vmem>> -> memref<4x384xf32, #tpu.memory_space<vmem>>
      %157 = tpu.memref_slice %arg11[%c0_i32_140] : memref<2x!tpu.dma_semaphore, #tpu.memory_space<semaphore_mem>> -> memref<1x!tpu.dma_semaphore, #tpu.memory_space<semaphore_mem>>
      %158 = tpu.memref_squeeze %157 : memref<1x!tpu.dma_semaphore, #tpu.memory_space<semaphore_mem>> -> memref<!tpu.dma_semaphore, #tpu.memory_space<semaphore_mem>>
      tpu.enqueue_dma source(%154 : memref<4x384xf32, #tpu.memory_space<any>>) target(%156 : memref<4x384xf32, #tpu.memory_space<vmem>>) target_semaphore(%158 : memref<!tpu.dma_semaphore, #tpu.memory_space<semaphore_mem>>)
    } else {
    }
    %c128_i32 = arith.constant 128 : i32
    %6 = arith.muli %arg1, %c128_i32 : i32
    %7 = tpu.assume_multiple %6, 128 : i32
    %c0_i32_1 = arith.constant 0 : i32
    %8 = tpu.memref_slice %arg2[%arg0, %c0_i32_1, %7] : memref<2x4x768xf32, #tpu.memory_space<any>> -> memref<1x4x384xf32, #tpu.memory_space<any>>
    %9 = tpu.memref_squeeze %8 : memref<1x4x384xf32, #tpu.memory_space<any>> -> memref<4x384xf32, #tpu.memory_space<any>>
    %c0_i32_2 = arith.constant 0 : i32
    %c0_i32_3 = arith.constant 0 : i32
    %10 = tpu.memref_slice %arg9[%2, %c0_i32_2, %c0_i32_3] : memref<2x4x384xf32, #tpu.memory_space<vmem>> -> memref<1x4x384xf32, #tpu.memory_space<vmem>>
    %11 = tpu.memref_squeeze %10 : memref<1x4x384xf32, #tpu.memory_space<vmem>> -> memref<4x384xf32, #tpu.memory_space<vmem>>
    %12 = tpu.memref_slice %arg11[%2] : memref<2x!tpu.dma_semaphore, #tpu.memory_space<semaphore_mem>> -> memref<1x!tpu.dma_semaphore, #tpu.memory_space<semaphore_mem>>
    %13 = tpu.memref_squeeze %12 : memref<1x!tpu.dma_semaphore, #tpu.memory_space<semaphore_mem>> -> memref<!tpu.dma_semaphore, #tpu.memory_space<semaphore_mem>>
    tpu.wait_dma2 semaphore(%13 : memref<!tpu.dma_semaphore, #tpu.memory_space<semaphore_mem>>) src(%9 : memref<4x384xf32, #tpu.memory_space<any>>) dst(%11 : memref<4x384xf32, #tpu.memory_space<vmem>>)
    %c1_i32_4 = arith.constant 1 : i32
    %14 = arith.addi %1, %c1_i32_4 : i32
    %c8_i32 = arith.constant 8 : i32
    %15 = arith.cmpi slt, %14, %c8_i32 : i32
    %16 = arith.extui %15 : i1 to i32
    %c0_i32_5 = arith.constant 0 : i32
    %17 = arith.cmpi ne, %16, %c0_i32_5 : i32
    scf.if %17 {
      %c1_i32_138 = arith.constant 1 : i32
      %151 = arith.addi %arg1, %c1_i32_138 : i32
      %c4_i32_139 = arith.constant 4 : i32
      %152 = arith.cmpi slt, %151, %c4_i32_139 : i32
      %c1_i32_140 = arith.constant 1 : i32
      %153 = arith.addi %arg1, %c1_i32_140 : i32
      %c0_i32_141 = arith.constant 0 : i32
      %154 = arith.select %152, %153, %c0_i32_141 : i32
      %c1_i32_142 = arith.constant 1 : i32
      %155 = arith.addi %arg0, %c1_i32_142 : i32
      %156 = arith.select %152, %arg0, %155 : i32
      %c1_i32_143 = arith.constant 1 : i32
      %157 = arith.subi %c1_i32_143, %2 : i32
      %c128_i32_144 = arith.constant 128 : i32
      %158 = arith.muli %154, %c128_i32_144 : i32
      %159 = tpu.assume_multiple %158, 128 : i32
      %c0_i32_145 = arith.constant 0 : i32
      %160 = tpu.memref_slice %arg2[%156, %c0_i32_145, %159] : memref<2x4x768xf32, #tpu.memory_space<any>> -> memref<1x4x384xf32, #tpu.memory_space<any>>
      %161 = tpu.memref_squeeze %160 : memref<1x4x384xf32, #tpu.memory_space<any>> -> memref<4x384xf32, #tpu.memory_space<any>>
      %c0_i32_146 = arith.constant 0 : i32
      %c0_i32_147 = arith.constant 0 : i32
      %162 = tpu.memref_slice %arg9[%157, %c0_i32_146, %c0_i32_147] : memref<2x4x384xf32, #tpu.memory_space<vmem>> -> memref<1x4x384xf32, #tpu.memory_space<vmem>>
      %163 = tpu.memref_squeeze %162 : memref<1x4x384xf32, #tpu.memory_space<vmem>> -> memref<4x384xf32, #tpu.memory_space<vmem>>
      %164 = tpu.memref_slice %arg11[%157] : memref<2x!tpu.dma_semaphore, #tpu.memory_space<semaphore_mem>> -> memref<1x!tpu.dma_semaphore, #tpu.memory_space<semaphore_mem>>
      %165 = tpu.memref_squeeze %164 : memref<1x!tpu.dma_semaphore, #tpu.memory_space<semaphore_mem>> -> memref<!tpu.dma_semaphore, #tpu.memory_space<semaphore_mem>>
      tpu.enqueue_dma source(%161 : memref<4x384xf32, #tpu.memory_space<any>>) target(%163 : memref<4x384xf32, #tpu.memory_space<vmem>>) target_semaphore(%165 : memref<!tpu.dma_semaphore, #tpu.memory_space<semaphore_mem>>)
    } else {
    }
    %c0_i32_6 = arith.constant 0 : i32
    %c0_i32_7 = arith.constant 0 : i32
    %18 = tpu.memref_slice %arg9[%2, %c0_i32_6, %c0_i32_7] : memref<2x4x384xf32, #tpu.memory_space<vmem>> -> memref<1x4x384xf32, #tpu.memory_space<vmem>>
    %19 = tpu.memref_squeeze %18 : memref<1x4x384xf32, #tpu.memory_space<vmem>> -> memref<4x384xf32, #tpu.memory_space<vmem>>
    %c0 = arith.constant 0 : index
    %c46 = arith.constant 46 : index
    %20 = vector.load %19[%c0, %c46] : memref<4x384xf32, #tpu.memory_space<vmem>>, vector<4x128xf32>
    %c0_8 = arith.constant 0 : index
    %c0_9 = arith.constant 0 : index
    %21 = vector.load %arg10[%c0_8, %c0_9] : memref<108x128xf32, #tpu.memory_space<vmem>>, vector<4x128xf32>
    tpu.vector_store %arg10[%c0_8, %c0_9], %20 {strides = array<i32>} : memref<108x128xf32, #tpu.memory_space<vmem>>, vector<4x128xf32>,
    %c0_i32_10 = arith.constant 0 : i32
    %c0_i32_11 = arith.constant 0 : i32
    %22 = tpu.memref_slice %arg9[%2, %c0_i32_10, %c0_i32_11] : memref<2x4x384xf32, #tpu.memory_space<vmem>> -> memref<1x4x384xf32, #tpu.memory_space<vmem>>
    %23 = tpu.memref_squeeze %22 : memref<1x4x384xf32, #tpu.memory_space<vmem>> -> memref<4x384xf32, #tpu.memory_space<vmem>>
    %c0_12 = arith.constant 0 : index
    %c47 = arith.constant 47 : index
    %24 = vector.load %23[%c0_12, %c47] : memref<4x384xf32, #tpu.memory_space<vmem>>, vector<4x128xf32>
    %c4 = arith.constant 4 : index
    %c0_13 = arith.constant 0 : index
    %25 = vector.load %arg10[%c4, %c0_13] : memref<108x128xf32, #tpu.memory_space<vmem>>, vector<4x128xf32>
    tpu.vector_store %arg10[%c4, %c0_13], %24 {strides = array<i32>} : memref<108x128xf32, #tpu.memory_space<vmem>>, vector<4x128xf32>,
    %c0_i32_14 = arith.constant 0 : i32
    %c0_i32_15 = arith.constant 0 : i32
    %26 = tpu.memref_slice %arg9[%2, %c0_i32_14, %c0_i32_15] : memref<2x4x384xf32, #tpu.memory_space<vmem>> -> memref<1x4x384xf32, #tpu.memory_space<vmem>>
    %27 = tpu.memref_squeeze %26 : memref<1x4x384xf32, #tpu.memory_space<vmem>> -> memref<4x384xf32, #tpu.memory_space<vmem>>
    %c0_16 = arith.constant 0 : index
    %c48 = arith.constant 48 : index
    %28 = vector.load %27[%c0_16, %c48] : memref<4x384xf32, #tpu.memory_space<vmem>>, vector<4x128xf32>
    %c8 = arith.constant 8 : index
    %c0_17 = arith.constant 0 : index
    %29 = vector.load %arg10[%c8, %c0_17] : memref<108x128xf32, #tpu.memory_space<vmem>>, vector<4x128xf32>
    tpu.vector_store %arg10[%c8, %c0_17], %28 {strides = array<i32>} : memref<108x128xf32, #tpu.memory_space<vmem>>, vector<4x128xf32>,
    %c0_i32_18 = arith.constant 0 : i32
    %c0_i32_19 = arith.constant 0 : i32
    %30 = tpu.memref_slice %arg9[%2, %c0_i32_18, %c0_i32_19] : memref<2x4x384xf32, #tpu.memory_space<vmem>> -> memref<1x4x384xf32, #tpu.memory_space<vmem>>
    %31 = tpu.memref_squeeze %30 : memref<1x4x384xf32, #tpu.memory_space<vmem>> -> memref<4x384xf32, #tpu.memory_space<vmem>>
    %c0_20 = arith.constant 0 : index
    %c55 = arith.constant 55 : index
    %32 = vector.load %31[%c0_20, %c55] : memref<4x384xf32, #tpu.memory_space<vmem>>, vector<4x128xf32>
    %c12 = arith.constant 12 : index
    %c0_21 = arith.constant 0 : index
    %33 = vector.load %arg10[%c12, %c0_21] : memref<108x128xf32, #tpu.memory_space<vmem>>, vector<4x128xf32>
    tpu.vector_store %arg10[%c12, %c0_21], %32 {strides = array<i32>} : memref<108x128xf32, #tpu.memory_space<vmem>>, vector<4x128xf32>,
    %c0_i32_22 = arith.constant 0 : i32
    %c0_i32_23 = arith.constant 0 : i32
    %34 = tpu.memref_slice %arg9[%2, %c0_i32_22, %c0_i32_23] : memref<2x4x384xf32, #tpu.memory_space<vmem>> -> memref<1x4x384xf32, #tpu.memory_space<vmem>>
    %35 = tpu.memref_squeeze %34 : memref<1x4x384xf32, #tpu.memory_space<vmem>> -> memref<4x384xf32, #tpu.memory_space<vmem>>
    %c0_24 = arith.constant 0 : index
    %c56 = arith.constant 56 : index
    %36 = vector.load %35[%c0_24, %c56] : memref<4x384xf32, #tpu.memory_space<vmem>>, vector<4x128xf32>
    %c16 = arith.constant 16 : index
    %c0_25 = arith.constant 0 : index
    %37 = vector.load %arg10[%c16, %c0_25] : memref<108x128xf32, #tpu.memory_space<vmem>>, vector<4x128xf32>
    tpu.vector_store %arg10[%c16, %c0_25], %36 {strides = array<i32>} : memref<108x128xf32, #tpu.memory_space<vmem>>, vector<4x128xf32>,
    %c0_i32_26 = arith.constant 0 : i32
    %c0_i32_27 = arith.constant 0 : i32
    %38 = tpu.memref_slice %arg9[%2, %c0_i32_26, %c0_i32_27] : memref<2x4x384xf32, #tpu.memory_space<vmem>> -> memref<1x4x384xf32, #tpu.memory_space<vmem>>
    %39 = tpu.memref_squeeze %38 : memref<1x4x384xf32, #tpu.memory_space<vmem>> -> memref<4x384xf32, #tpu.memory_space<vmem>>
    %c0_28 = arith.constant 0 : index
    %c57 = arith.constant 57 : index
    %40 = vector.load %39[%c0_28, %c57] : memref<4x384xf32, #tpu.memory_space<vmem>>, vector<4x128xf32>
    %c20 = arith.constant 20 : index
    %c0_29 = arith.constant 0 : index
    %41 = vector.load %arg10[%c20, %c0_29] : memref<108x128xf32, #tpu.memory_space<vmem>>, vector<4x128xf32>
    tpu.vector_store %arg10[%c20, %c0_29], %40 {strides = array<i32>} : memref<108x128xf32, #tpu.memory_space<vmem>>, vector<4x128xf32>,
    %c0_i32_30 = arith.constant 0 : i32
    %c0_i32_31 = arith.constant 0 : i32
    %42 = tpu.memref_slice %arg9[%2, %c0_i32_30, %c0_i32_31] : memref<2x4x384xf32, #tpu.memory_space<vmem>> -> memref<1x4x384xf32, #tpu.memory_space<vmem>>
    %43 = tpu.memref_squeeze %42 : memref<1x4x384xf32, #tpu.memory_space<vmem>> -> memref<4x384xf32, #tpu.memory_space<vmem>>
    %c0_32 = arith.constant 0 : index
    %c64 = arith.constant 64 : index
    %44 = vector.load %43[%c0_32, %c64] : memref<4x384xf32, #tpu.memory_space<vmem>>, vector<4x128xf32>
    %c24 = arith.constant 24 : index
    %c0_33 = arith.constant 0 : index
    %45 = vector.load %arg10[%c24, %c0_33] : memref<108x128xf32, #tpu.memory_space<vmem>>, vector<4x128xf32>
    tpu.vector_store %arg10[%c24, %c0_33], %44 {strides = array<i32>} : memref<108x128xf32, #tpu.memory_space<vmem>>, vector<4x128xf32>,
    %c0_i32_34 = arith.constant 0 : i32
    %c0_i32_35 = arith.constant 0 : i32
    %46 = tpu.memref_slice %arg9[%2, %c0_i32_34, %c0_i32_35] : memref<2x4x384xf32, #tpu.memory_space<vmem>> -> memref<1x4x384xf32, #tpu.memory_space<vmem>>
    %47 = tpu.memref_squeeze %46 : memref<1x4x384xf32, #tpu.memory_space<vmem>> -> memref<4x384xf32, #tpu.memory_space<vmem>>
    %c0_36 = arith.constant 0 : index
    %c65 = arith.constant 65 : index
    %48 = vector.load %47[%c0_36, %c65] : memref<4x384xf32, #tpu.memory_space<vmem>>, vector<4x128xf32>
    %c28 = arith.constant 28 : index
    %c0_37 = arith.constant 0 : index
    %49 = vector.load %arg10[%c28, %c0_37] : memref<108x128xf32, #tpu.memory_space<vmem>>, vector<4x128xf32>
    tpu.vector_store %arg10[%c28, %c0_37], %48 {strides = array<i32>} : memref<108x128xf32, #tpu.memory_space<vmem>>, vector<4x128xf32>,
    %c0_i32_38 = arith.constant 0 : i32
    %c0_i32_39 = arith.constant 0 : i32
    %50 = tpu.memref_slice %arg9[%2, %c0_i32_38, %c0_i32_39] : memref<2x4x384xf32, #tpu.memory_space<vmem>> -> memref<1x4x384xf32, #tpu.memory_space<vmem>>
    %51 = tpu.memref_squeeze %50 : memref<1x4x384xf32, #tpu.memory_space<vmem>> -> memref<4x384xf32, #tpu.memory_space<vmem>>
    %c0_40 = arith.constant 0 : index
    %c66 = arith.constant 66 : index
    %52 = vector.load %51[%c0_40, %c66] : memref<4x384xf32, #tpu.memory_space<vmem>>, vector<4x128xf32>
    %c32 = arith.constant 32 : index
    %c0_41 = arith.constant 0 : index
    %53 = vector.load %arg10[%c32, %c0_41] : memref<108x128xf32, #tpu.memory_space<vmem>>, vector<4x128xf32>
    tpu.vector_store %arg10[%c32, %c0_41], %52 {strides = array<i32>} : memref<108x128xf32, #tpu.memory_space<vmem>>, vector<4x128xf32>,
    %c0_i32_42 = arith.constant 0 : i32
    %c0_i32_43 = arith.constant 0 : i32
    %54 = tpu.memref_slice %arg9[%2, %c0_i32_42, %c0_i32_43] : memref<2x4x384xf32, #tpu.memory_space<vmem>> -> memref<1x4x384xf32, #tpu.memory_space<vmem>>
    %55 = tpu.memref_squeeze %54 : memref<1x4x384xf32, #tpu.memory_space<vmem>> -> memref<4x384xf32, #tpu.memory_space<vmem>>
    %c0_44 = arith.constant 0 : index
    %c118 = arith.constant 118 : index
    %56 = vector.load %55[%c0_44, %c118] : memref<4x384xf32, #tpu.memory_space<vmem>>, vector<4x128xf32>
    %c36 = arith.constant 36 : index
    %c0_45 = arith.constant 0 : index
    %57 = vector.load %arg10[%c36, %c0_45] : memref<108x128xf32, #tpu.memory_space<vmem>>, vector<4x128xf32>
    tpu.vector_store %arg10[%c36, %c0_45], %56 {strides = array<i32>} : memref<108x128xf32, #tpu.memory_space<vmem>>, vector<4x128xf32>,
    %c0_i32_46 = arith.constant 0 : i32
    %c0_i32_47 = arith.constant 0 : i32
    %58 = tpu.memref_slice %arg9[%2, %c0_i32_46, %c0_i32_47] : memref<2x4x384xf32, #tpu.memory_space<vmem>> -> memref<1x4x384xf32, #tpu.memory_space<vmem>>
    %59 = tpu.memref_squeeze %58 : memref<1x4x384xf32, #tpu.memory_space<vmem>> -> memref<4x384xf32, #tpu.memory_space<vmem>>
    %c0_48 = arith.constant 0 : index
    %c119 = arith.constant 119 : index
    %60 = vector.load %59[%c0_48, %c119] : memref<4x384xf32, #tpu.memory_space<vmem>>, vector<4x128xf32>
    %c40 = arith.constant 40 : index
    %c0_49 = arith.constant 0 : index
    %61 = vector.load %arg10[%c40, %c0_49] : memref<108x128xf32, #tpu.memory_space<vmem>>, vector<4x128xf32>
    tpu.vector_store %arg10[%c40, %c0_49], %60 {strides = array<i32>} : memref<108x128xf32, #tpu.memory_space<vmem>>, vector<4x128xf32>,
    %c0_i32_50 = arith.constant 0 : i32
    %c0_i32_51 = arith.constant 0 : i32
    %62 = tpu.memref_slice %arg9[%2, %c0_i32_50, %c0_i32_51] : memref<2x4x384xf32, #tpu.memory_space<vmem>> -> memref<1x4x384xf32, #tpu.memory_space<vmem>>
    %63 = tpu.memref_squeeze %62 : memref<1x4x384xf32, #tpu.memory_space<vmem>> -> memref<4x384xf32, #tpu.memory_space<vmem>>
    %c0_52 = arith.constant 0 : index
    %c120 = arith.constant 120 : index
    %64 = vector.load %63[%c0_52, %c120] : memref<4x384xf32, #tpu.memory_space<vmem>>, vector<4x128xf32>
    %c44 = arith.constant 44 : index
    %c0_53 = arith.constant 0 : index
    %65 = vector.load %arg10[%c44, %c0_53] : memref<108x128xf32, #tpu.memory_space<vmem>>, vector<4x128xf32>
    tpu.vector_store %arg10[%c44, %c0_53], %64 {strides = array<i32>} : memref<108x128xf32, #tpu.memory_space<vmem>>, vector<4x128xf32>,
    %c0_i32_54 = arith.constant 0 : i32
    %c0_i32_55 = arith.constant 0 : i32
    %66 = tpu.memref_slice %arg9[%2, %c0_i32_54, %c0_i32_55] : memref<2x4x384xf32, #tpu.memory_space<vmem>> -> memref<1x4x384xf32, #tpu.memory_space<vmem>>
    %67 = tpu.memref_squeeze %66 : memref<1x4x384xf32, #tpu.memory_space<vmem>> -> memref<4x384xf32, #tpu.memory_space<vmem>>
    %c0_56 = arith.constant 0 : index
    %c127 = arith.constant 127 : index
    %68 = vector.load %67[%c0_56, %c127] : memref<4x384xf32, #tpu.memory_space<vmem>>, vector<4x128xf32>
    %c48_57 = arith.constant 48 : index
    %c0_58 = arith.constant 0 : index
    %69 = vector.load %arg10[%c48_57, %c0_58] : memref<108x128xf32, #tpu.memory_space<vmem>>, vector<4x128xf32>
    tpu.vector_store %arg10[%c48_57, %c0_58], %68 {strides = array<i32>} : memref<108x128xf32, #tpu.memory_space<vmem>>, vector<4x128xf32>,
    %c0_i32_59 = arith.constant 0 : i32
    %c0_i32_60 = arith.constant 0 : i32
    %70 = tpu.memref_slice %arg9[%2, %c0_i32_59, %c0_i32_60] : memref<2x4x384xf32, #tpu.memory_space<vmem>> -> memref<1x4x384xf32, #tpu.memory_space<vmem>>
    %71 = tpu.memref_squeeze %70 : memref<1x4x384xf32, #tpu.memory_space<vmem>> -> memref<4x384xf32, #tpu.memory_space<vmem>>
    %c0_61 = arith.constant 0 : index
    %c128 = arith.constant 128 : index
    %72 = vector.load %71[%c0_61, %c128] : memref<4x384xf32, #tpu.memory_space<vmem>>, vector<4x128xf32>
    %c52 = arith.constant 52 : index
    %c0_62 = arith.constant 0 : index
    %73 = vector.load %arg10[%c52, %c0_62] : memref<108x128xf32, #tpu.memory_space<vmem>>, vector<4x128xf32>
    tpu.vector_store %arg10[%c52, %c0_62], %72 {strides = array<i32>} : memref<108x128xf32, #tpu.memory_space<vmem>>, vector<4x128xf32>,
    %c0_i32_63 = arith.constant 0 : i32
    %c0_i32_64 = arith.constant 0 : i32
    %74 = tpu.memref_slice %arg9[%2, %c0_i32_63, %c0_i32_64] : memref<2x4x384xf32, #tpu.memory_space<vmem>> -> memref<1x4x384xf32, #tpu.memory_space<vmem>>
    %75 = tpu.memref_squeeze %74 : memref<1x4x384xf32, #tpu.memory_space<vmem>> -> memref<4x384xf32, #tpu.memory_space<vmem>>
    %c0_65 = arith.constant 0 : index
    %c129 = arith.constant 129 : index
    %76 = vector.load %75[%c0_65, %c129] : memref<4x384xf32, #tpu.memory_space<vmem>>, vector<4x128xf32>
    %c56_66 = arith.constant 56 : index
    %c0_67 = arith.constant 0 : index
    %77 = vector.load %arg10[%c56_66, %c0_67] : memref<108x128xf32, #tpu.memory_space<vmem>>, vector<4x128xf32>
    tpu.vector_store %arg10[%c56_66, %c0_67], %76 {strides = array<i32>} : memref<108x128xf32, #tpu.memory_space<vmem>>, vector<4x128xf32>,
    %c0_i32_68 = arith.constant 0 : i32
    %c0_i32_69 = arith.constant 0 : i32
    %78 = tpu.memref_slice %arg9[%2, %c0_i32_68, %c0_i32_69] : memref<2x4x384xf32, #tpu.memory_space<vmem>> -> memref<1x4x384xf32, #tpu.memory_space<vmem>>
    %79 = tpu.memref_squeeze %78 : memref<1x4x384xf32, #tpu.memory_space<vmem>> -> memref<4x384xf32, #tpu.memory_space<vmem>>
    %c0_70 = arith.constant 0 : index
    %c136 = arith.constant 136 : index
    %80 = vector.load %79[%c0_70, %c136] : memref<4x384xf32, #tpu.memory_space<vmem>>, vector<4x128xf32>
    %c60 = arith.constant 60 : index
    %c0_71 = arith.constant 0 : index
    %81 = vector.load %arg10[%c60, %c0_71] : memref<108x128xf32, #tpu.memory_space<vmem>>, vector<4x128xf32>
    tpu.vector_store %arg10[%c60, %c0_71], %80 {strides = array<i32>} : memref<108x128xf32, #tpu.memory_space<vmem>>, vector<4x128xf32>,
    %c0_i32_72 = arith.constant 0 : i32
    %c0_i32_73 = arith.constant 0 : i32
    %82 = tpu.memref_slice %arg9[%2, %c0_i32_72, %c0_i32_73] : memref<2x4x384xf32, #tpu.memory_space<vmem>> -> memref<1x4x384xf32, #tpu.memory_space<vmem>>
    %83 = tpu.memref_squeeze %82 : memref<1x4x384xf32, #tpu.memory_space<vmem>> -> memref<4x384xf32, #tpu.memory_space<vmem>>
    %c0_74 = arith.constant 0 : index
    %c137 = arith.constant 137 : index
    %84 = vector.load %83[%c0_74, %c137] : memref<4x384xf32, #tpu.memory_space<vmem>>, vector<4x128xf32>
    %c64_75 = arith.constant 64 : index
    %c0_76 = arith.constant 0 : index
    %85 = vector.load %arg10[%c64_75, %c0_76] : memref<108x128xf32, #tpu.memory_space<vmem>>, vector<4x128xf32>
    tpu.vector_store %arg10[%c64_75, %c0_76], %84 {strides = array<i32>} : memref<108x128xf32, #tpu.memory_space<vmem>>, vector<4x128xf32>,
    %c0_i32_77 = arith.constant 0 : i32
    %c0_i32_78 = arith.constant 0 : i32
    %86 = tpu.memref_slice %arg9[%2, %c0_i32_77, %c0_i32_78] : memref<2x4x384xf32, #tpu.memory_space<vmem>> -> memref<1x4x384xf32, #tpu.memory_space<vmem>>
    %87 = tpu.memref_squeeze %86 : memref<1x4x384xf32, #tpu.memory_space<vmem>> -> memref<4x384xf32, #tpu.memory_space<vmem>>
    %c0_79 = arith.constant 0 : index
    %c138 = arith.constant 138 : index
    %88 = vector.load %87[%c0_79, %c138] : memref<4x384xf32, #tpu.memory_space<vmem>>, vector<4x128xf32>
    %c68 = arith.constant 68 : index
    %c0_80 = arith.constant 0 : index
    %89 = vector.load %arg10[%c68, %c0_80] : memref<108x128xf32, #tpu.memory_space<vmem>>, vector<4x128xf32>
    tpu.vector_store %arg10[%c68, %c0_80], %88 {strides = array<i32>} : memref<108x128xf32, #tpu.memory_space<vmem>>, vector<4x128xf32>,
    %c0_i32_81 = arith.constant 0 : i32
    %c0_i32_82 = arith.constant 0 : i32
    %90 = tpu.memref_slice %arg9[%2, %c0_i32_81, %c0_i32_82] : memref<2x4x384xf32, #tpu.memory_space<vmem>> -> memref<1x4x384xf32, #tpu.memory_space<vmem>>
    %91 = tpu.memref_squeeze %90 : memref<1x4x384xf32, #tpu.memory_space<vmem>> -> memref<4x384xf32, #tpu.memory_space<vmem>>
    %c0_83 = arith.constant 0 : index
    %c190 = arith.constant 190 : index
    %92 = vector.load %91[%c0_83, %c190] : memref<4x384xf32, #tpu.memory_space<vmem>>, vector<4x128xf32>
    %c72 = arith.constant 72 : index
    %c0_84 = arith.constant 0 : index
    %93 = vector.load %arg10[%c72, %c0_84] : memref<108x128xf32, #tpu.memory_space<vmem>>, vector<4x128xf32>
    tpu.vector_store %arg10[%c72, %c0_84], %92 {strides = array<i32>} : memref<108x128xf32, #tpu.memory_space<vmem>>, vector<4x128xf32>,
    %c0_i32_85 = arith.constant 0 : i32
    %c0_i32_86 = arith.constant 0 : i32
    %94 = tpu.memref_slice %arg9[%2, %c0_i32_85, %c0_i32_86] : memref<2x4x384xf32, #tpu.memory_space<vmem>> -> memref<1x4x384xf32, #tpu.memory_space<vmem>>
    %95 = tpu.memref_squeeze %94 : memref<1x4x384xf32, #tpu.memory_space<vmem>> -> memref<4x384xf32, #tpu.memory_space<vmem>>
    %c0_87 = arith.constant 0 : index
    %c191 = arith.constant 191 : index
    %96 = vector.load %95[%c0_87, %c191] : memref<4x384xf32, #tpu.memory_space<vmem>>, vector<4x128xf32>
    %c76 = arith.constant 76 : index
    %c0_88 = arith.constant 0 : index
    %97 = vector.load %arg10[%c76, %c0_88] : memref<108x128xf32, #tpu.memory_space<vmem>>, vector<4x128xf32>
    tpu.vector_store %arg10[%c76, %c0_88], %96 {strides = array<i32>} : memref<108x128xf32, #tpu.memory_space<vmem>>, vector<4x128xf32>,
    %c0_i32_89 = arith.constant 0 : i32
    %c0_i32_90 = arith.constant 0 : i32
    %98 = tpu.memref_slice %arg9[%2, %c0_i32_89, %c0_i32_90] : memref<2x4x384xf32, #tpu.memory_space<vmem>> -> memref<1x4x384xf32, #tpu.memory_space<vmem>>
    %99 = tpu.memref_squeeze %98 : memref<1x4x384xf32, #tpu.memory_space<vmem>> -> memref<4x384xf32, #tpu.memory_space<vmem>>
    %c0_91 = arith.constant 0 : index
    %c192 = arith.constant 192 : index
    %100 = vector.load %99[%c0_91, %c192] : memref<4x384xf32, #tpu.memory_space<vmem>>, vector<4x128xf32>
    %c80 = arith.constant 80 : index
    %c0_92 = arith.constant 0 : index
    %101 = vector.load %arg10[%c80, %c0_92] : memref<108x128xf32, #tpu.memory_space<vmem>>, vector<4x128xf32>
    tpu.vector_store %arg10[%c80, %c0_92], %100 {strides = array<i32>} : memref<108x128xf32, #tpu.memory_space<vmem>>, vector<4x128xf32>,
    %c0_i32_93 = arith.constant 0 : i32
    %c0_i32_94 = arith.constant 0 : i32
    %102 = tpu.memref_slice %arg9[%2, %c0_i32_93, %c0_i32_94] : memref<2x4x384xf32, #tpu.memory_space<vmem>> -> memref<1x4x384xf32, #tpu.memory_space<vmem>>
    %103 = tpu.memref_squeeze %102 : memref<1x4x384xf32, #tpu.memory_space<vmem>> -> memref<4x384xf32, #tpu.memory_space<vmem>>
    %c0_95 = arith.constant 0 : index
    %c199 = arith.constant 199 : index
    %104 = vector.load %103[%c0_95, %c199] : memref<4x384xf32, #tpu.memory_space<vmem>>, vector<4x128xf32>
    %c84 = arith.constant 84 : index
    %c0_96 = arith.constant 0 : index
    %105 = vector.load %arg10[%c84, %c0_96] : memref<108x128xf32, #tpu.memory_space<vmem>>, vector<4x128xf32>
    tpu.vector_store %arg10[%c84, %c0_96], %104 {strides = array<i32>} : memref<108x128xf32, #tpu.memory_space<vmem>>, vector<4x128xf32>,
    %c0_i32_97 = arith.constant 0 : i32
    %c0_i32_98 = arith.constant 0 : i32
    %106 = tpu.memref_slice %arg9[%2, %c0_i32_97, %c0_i32_98] : memref<2x4x384xf32, #tpu.memory_space<vmem>> -> memref<1x4x384xf32, #tpu.memory_space<vmem>>
    %107 = tpu.memref_squeeze %106 : memref<1x4x384xf32, #tpu.memory_space<vmem>> -> memref<4x384xf32, #tpu.memory_space<vmem>>
    %c0_99 = arith.constant 0 : index
    %c200 = arith.constant 200 : index
    %108 = vector.load %107[%c0_99, %c200] : memref<4x384xf32, #tpu.memory_space<vmem>>, vector<4x128xf32>
    %c88 = arith.constant 88 : index
    %c0_100 = arith.constant 0 : index
    %109 = vector.load %arg10[%c88, %c0_100] : memref<108x128xf32, #tpu.memory_space<vmem>>, vector<4x128xf32>
    tpu.vector_store %arg10[%c88, %c0_100], %108 {strides = array<i32>} : memref<108x128xf32, #tpu.memory_space<vmem>>, vector<4x128xf32>,
    %c0_i32_101 = arith.constant 0 : i32
    %c0_i32_102 = arith.constant 0 : i32
    %110 = tpu.memref_slice %arg9[%2, %c0_i32_101, %c0_i32_102] : memref<2x4x384xf32, #tpu.memory_space<vmem>> -> memref<1x4x384xf32, #tpu.memory_space<vmem>>
    %111 = tpu.memref_squeeze %110 : memref<1x4x384xf32, #tpu.memory_space<vmem>> -> memref<4x384xf32, #tpu.memory_space<vmem>>
    %c0_103 = arith.constant 0 : index
    %c201 = arith.constant 201 : index
    %112 = vector.load %111[%c0_103, %c201] : memref<4x384xf32, #tpu.memory_space<vmem>>, vector<4x128xf32>
    %c92 = arith.constant 92 : index
    %c0_104 = arith.constant 0 : index
    %113 = vector.load %arg10[%c92, %c0_104] : memref<108x128xf32, #tpu.memory_space<vmem>>, vector<4x128xf32>
    tpu.vector_store %arg10[%c92, %c0_104], %112 {strides = array<i32>} : memref<108x128xf32, #tpu.memory_space<vmem>>, vector<4x128xf32>,
    %c0_i32_105 = arith.constant 0 : i32
    %c0_i32_106 = arith.constant 0 : i32
    %114 = tpu.memref_slice %arg9[%2, %c0_i32_105, %c0_i32_106] : memref<2x4x384xf32, #tpu.memory_space<vmem>> -> memref<1x4x384xf32, #tpu.memory_space<vmem>>
    %115 = tpu.memref_squeeze %114 : memref<1x4x384xf32, #tpu.memory_space<vmem>> -> memref<4x384xf32, #tpu.memory_space<vmem>>
    %c0_107 = arith.constant 0 : index
    %c208 = arith.constant 208 : index
    %116 = vector.load %115[%c0_107, %c208] : memref<4x384xf32, #tpu.memory_space<vmem>>, vector<4x128xf32>
    %c96 = arith.constant 96 : index
    %c0_108 = arith.constant 0 : index
    %117 = vector.load %arg10[%c96, %c0_108] : memref<108x128xf32, #tpu.memory_space<vmem>>, vector<4x128xf32>
    tpu.vector_store %arg10[%c96, %c0_108], %116 {strides = array<i32>} : memref<108x128xf32, #tpu.memory_space<vmem>>, vector<4x128xf32>,
    %c0_i32_109 = arith.constant 0 : i32
    %c0_i32_110 = arith.constant 0 : i32
    %118 = tpu.memref_slice %arg9[%2, %c0_i32_109, %c0_i32_110] : memref<2x4x384xf32, #tpu.memory_space<vmem>> -> memref<1x4x384xf32, #tpu.memory_space<vmem>>
    %119 = tpu.memref_squeeze %118 : memref<1x4x384xf32, #tpu.memory_space<vmem>> -> memref<4x384xf32, #tpu.memory_space<vmem>>
    %c0_111 = arith.constant 0 : index
    %c209 = arith.constant 209 : index
    %120 = vector.load %119[%c0_111, %c209] : memref<4x384xf32, #tpu.memory_space<vmem>>, vector<4x128xf32>
    %c100 = arith.constant 100 : index
    %c0_112 = arith.constant 0 : index
    %121 = vector.load %arg10[%c100, %c0_112] : memref<108x128xf32, #tpu.memory_space<vmem>>, vector<4x128xf32>
    tpu.vector_store %arg10[%c100, %c0_112], %120 {strides = array<i32>} : memref<108x128xf32, #tpu.memory_space<vmem>>, vector<4x128xf32>,
    %c0_i32_113 = arith.constant 0 : i32
    %c0_i32_114 = arith.constant 0 : i32
    %122 = tpu.memref_slice %arg9[%2, %c0_i32_113, %c0_i32_114] : memref<2x4x384xf32, #tpu.memory_space<vmem>> -> memref<1x4x384xf32, #tpu.memory_space<vmem>>
    %123 = tpu.memref_squeeze %122 : memref<1x4x384xf32, #tpu.memory_space<vmem>> -> memref<4x384xf32, #tpu.memory_space<vmem>>
    %c0_115 = arith.constant 0 : index
    %c210 = arith.constant 210 : index
    %124 = vector.load %123[%c0_115, %c210] : memref<4x384xf32, #tpu.memory_space<vmem>>, vector<4x128xf32>
    %c104 = arith.constant 104 : index
    %c0_116 = arith.constant 0 : index
    %125 = vector.load %arg10[%c104, %c0_116] : memref<108x128xf32, #tpu.memory_space<vmem>>, vector<4x128xf32>
    tpu.vector_store %arg10[%c104, %c0_116], %124 {strides = array<i32>} : memref<108x128xf32, #tpu.memory_space<vmem>>, vector<4x128xf32>,
    %c0_117 = arith.constant 0 : index
    %c0_118 = arith.constant 0 : index
    %126 = vector.load %arg3[%c0_117, %c0_118] : memref<2x108xf32, #tpu.memory_space<vmem>>, vector<2x108xf32>
    %c0_119 = arith.constant 0 : index
    %c0_120 = arith.constant 0 : index
    %127 = vector.load %arg10[%c0_119, %c0_120] : memref<108x128xf32, #tpu.memory_space<vmem>>, vector<108x128xf32>
    %cst = arith.constant dense<0.000000e+00> : vector<2x128xf32>
    %128 = tpu.matmul %126, %127, %cst {dimension_numbers = #tpu.dot_dimension_numbers<[1], [0], [0], [1], [0, 0, 1, 1], [], []>} : vector<2x108xf32>, vector<108x128xf32>, vector<2x128xf32> -> vector<2x128xf32>
    %c0_121 = arith.constant 0 : index
    %c0_122 = arith.constant 0 : index
    %129 = vector.load %arg5[%c0_121, %c0_122] : memref<1x128xf32, #tpu.memory_space<vmem>>, vector<1x128xf32>
    %130 = vector.broadcast %129 : vector<1x128xf32> to vector<2x128xf32>
    %131 = arith.mulf %128, %130 : vector<2x128xf32>
    %cst_123 = arith.constant dense<0.000000e+00> : vector<2xf32>
    %132 = vector.multi_reduction <add>, %131, %cst_123 [1] : vector<2x128xf32> to vector<2xf32>
    %133 = vector.shape_cast %132 : vector<2xf32> to vector<2x1xf32>
    %c0_124 = arith.constant 0 : index
    %c0_125 = arith.constant 0 : index
    %c0_126 = arith.constant 0 : index
    %c0_127 = arith.constant 0 : index
    %134 = vector.load %arg7[%c0_124, %c0_125, %c0_126, %c0_127] : memref<1x1x2x1xf32, #tpu.memory_space<vmem>>, vector<1x1x2x1xf32>
    %135 = vector.shape_cast %134 : vector<1x1x2x1xf32> to vector<2x1xf32>
    %136 = vector.shape_cast %133 : vector<2x1xf32> to vector<1x1x2x1xf32>
    tpu.vector_store %arg7[%c0_124, %c0_125, %c0_126, %c0_127], %136 {strides = array<i32>} : memref<1x1x2x1xf32, #tpu.memory_space<vmem>>, vector<1x1x2x1xf32>,
    %137 = arith.mulf %131, %131 : vector<2x128xf32>
    %cst_128 = arith.constant dense<0.000000e+00> : vector<2xf32>
    %138 = vector.multi_reduction <add>, %137, %cst_128 [1] : vector<2x128xf32> to vector<2xf32>
    %139 = vector.shape_cast %138 : vector<2xf32> to vector<2x1xf32>
    %c0_129 = arith.constant 0 : index
    %c0_130 = arith.constant 0 : index
    %c0_131 = arith.constant 0 : index
    %c0_132 = arith.constant 0 : index
    %140 = vector.load %arg8[%c0_129, %c0_130, %c0_131, %c0_132] : memref<1x1x2x1xf32, #tpu.memory_space<vmem>>, vector<1x1x2x1xf32>
    %141 = vector.shape_cast %140 : vector<1x1x2x1xf32> to vector<2x1xf32>
    %142 = vector.shape_cast %139 : vector<2x1xf32> to vector<1x1x2x1xf32>
    tpu.vector_store %arg8[%c0_129, %c0_130, %c0_131, %c0_132], %142 {strides = array<i32>} : memref<1x1x2x1xf32, #tpu.memory_space<vmem>>, vector<1x1x2x1xf32>,
    %c0_133 = arith.constant 0 : index
    %c0_134 = arith.constant 0 : index
    %143 = vector.load %arg4[%c0_133, %c0_134] : memref<2x1xf32, #tpu.memory_space<vmem>>, vector<2x1xf32>
    %144 = vector.broadcast %143 : vector<2x1xf32> to vector<2x128xf32>
    %145 = vector.broadcast %129 : vector<1x128xf32> to vector<2x128xf32>
    %146 = arith.mulf %144, %145 : vector<2x128xf32>
    %147 = arith.addf %131, %146 : vector<2x128xf32>
    %c0_135 = arith.constant 0 : index
    %c0_136 = arith.constant 0 : index
    %c0_137 = arith.constant 0 : index
    %148 = vector.load %arg6[%c0_135, %c0_136, %c0_137] : memref<1x2x128xf32, #tpu.memory_space<vmem>>, vector<1x2x128xf32>
    %149 = vector.shape_cast %148 : vector<1x2x128xf32> to vector<2x128xf32>
    %150 = vector.shape_cast %147 : vector<2x128xf32> to vector<1x2x128xf32>
    tpu.vector_store %arg6[%c0_135, %c0_136, %c0_137], %150 {strides = array<i32>} : memref<1x2x128xf32, #tpu.memory_space<vmem>>, vector<1x2x128xf32>,
    return
  }
  func.func @transform_1(%arg0: i32, %arg1: i32) -> (i32, i32) {
    %c0_i32 = arith.constant 0 : i32
    %c0_i32_0 = arith.constant 0 : i32
    %c0_i32_1 = arith.constant 0 : i32
    return %c0_i32, %c0_i32_0 : i32, i32
  }
  func.func @transform_2(%arg0: i32, %arg1: i32) -> (i32, i32) {
    %c0_i32 = arith.constant 0 : i32
    %c0_i32_0 = arith.constant 0 : i32
    %c0_i32_1 = arith.constant 0 : i32
    return %c0_i32, %c0_i32_0 : i32, i32
  }
  func.func @transform_3(%arg0: i32, %arg1: i32) -> (i32, i32) {
    %c0_i32 = arith.constant 0 : i32
    %c0_i32_0 = arith.constant 0 : i32
    return %c0_i32, %arg1 : i32, i32
  }
  func.func @transform_4(%arg0: i32, %arg1: i32) -> (i32, i32, i32) {
    %c0_i32 = arith.constant 0 : i32
    %c0_i32_0 = arith.constant 0 : i32
    return %arg0, %c0_i32, %arg1 : i32, i32, i32
  }
  func.func @transform_5(%arg0: i32, %arg1: i32) -> (i32, i32, i32, i32) {
    %c0_i32 = arith.constant 0 : i32
    %c0_i32_0 = arith.constant 0 : i32
    %c0_i32_1 = arith.constant 0 : i32
    return %arg0, %arg1, %c0_i32, %c0_i32_0 : i32, i32, i32, i32
  }
  func.func @transform_6(%arg0: i32, %arg1: i32) -> (i32, i32, i32, i32) {
    %c0_i32 = arith.constant 0 : i32
    %c0_i32_0 = arith.constant 0 : i32
    %c0_i32_1 = arith.constant 0 : i32
    return %arg0, %arg1, %c0_i32, %c0_i32_0 : i32, i32, i32, i32
  }
}

</mosaic_0001>

<llo_original>
// kernel: conv3d_pallas.1
$region0: #{conv3d_pallas.1}
  #allocation0 [shape = 'u32[]', space=smem, size = 0x4, offset = 0x4, fixed_abs, tag = 'smem constant byte address 0x4 - core index']
  #allocation1 [shape = 'u32[144,128]{1,0:T(1,128)}', space=vmem, size = 0x12000, scoped, tag = 'internal scratch']
  #allocation2 [shape = 'f32[2,4,384]{2,1,0:T(4,128)}', space=vmem, size = 0x3000, scoped, tag = 'scratch operand']
  #allocation3 [shape = 'f32[108,128]{1,0:T(8,128)}', space=vmem, size = 0xe000, scoped, tag = 'scratch operand']
  #allocation4 [shape = 's32[2]{0}', space=sflag, size = 0x8, scoped, tag = 'scratch operand']
  #allocation9 [shape = 's32[]', space=sflag, size = 0x4, offset = 0, fixed_abs, tag = 'sflag constant byte address 0x0 - dummy sync flag']
  #allocation10 [shape = 's32[]', space=sflag, size = 0x4, offset = 0, fixed_abs, tag = 'sflag constant byte address 0x0 - dummy sync flag']
  %s0 = inlined_call_operand.vmem [shape: f32[2,4,768], index: 0, kind: input, shape index: {}]
  %s1 = inlined_call_operand.vmem [shape: f32[2,108], index: 1, kind: input, shape index: {}]
  %s2 = inlined_call_operand.vmem [shape: f32[2,1], index: 2, kind: input, shape index: {}]
  %s3 = inlined_call_operand.vmem [shape: f32[1,512], index: 3, kind: input, shape index: {}]
  %s4 = inlined_call_operand.vmem [shape: f32[2,2,512], index: 4, kind: output, shape index: {0}]
  %s5 = inlined_call_operand.hbm [shape: f32[2,4,2,1], index: 5, kind: output, shape index: {1}]
  %s6 = inlined_call_operand.hbm [shape: f32[2,4,2,1], index: 6, kind: output, shape index: {2}]
  %7 = xla_tuple %s4, %s5, %s6
  %s8 = sld [smem:[#allocation0]]
  $region143: #{conv3d_pallas.1} parent=0
    _
  %s10 = ssub.s32 1, %s8
  %s11 = scalar_select 0, %s10, %s8
  $region1: #{conv3d_pallas.1} parent=0
    #allocation5 [shape = 'u8[2048]{0}', space=vmem, size = 0x800, scoped, tag = 'output window, operand 1']
    #allocation6 [shape = 's32[2]{0}', space=sflag, size = 0x8, scoped, tag = 'scoped memory for conv3d_pallas.1']
    #allocation7 [shape = 'u8[2048]{0}', space=vmem, size = 0x800, scoped, tag = 'output window, operand 2']
    #allocation8 [shape = 's32[2]{0}', space=sflag, size = 0x8, scoped, tag = 'scoped memory for conv3d_pallas.1']
    %12 = vsyncpa [#allocation6], 0
    %s13 = scalar_lea.sflag [#allocation6], 1
    %14 = vsyncpa %s13, 0
    %15 = vsyncpa [#allocation8], 0
    %s16 = scalar_lea.sflag [#allocation8], 1
    %17 = vsyncpa %s16, 0
    loop: start=0, step=1, limit=10
    $region2: #{conv3d_pallas.1} parent=1 // loop_pre_header
      _
    $region3: #{conv3d_pallas.1} parent=1 // loop_header
      %s19 = sphi 0, %s23
      %p20 = scmp.ge.s32.totalorder %s19, 10
      %s26 = sphi 0, %s38
      %s27 = sphi 0, %s34
      %s28 = sphi 0, %s26
      %s29 = sphi 0, %s27
      %s30 = sphi 0, %s28
      %s31 = sphi 0, %s29
      %s39 = sphi 0, %s39
      %s41 = sphi 0, %s39
      %s42 = sphi 0, %s41
      %s56 = sphi 0, %s42
      %s60 = sphi 0, %s60
      %s62 = sphi 0, %s60
      %s63 = sphi 0, %s62
      %s77 = sphi 0, %s63
      %s83 = sphi 0, %s85
      %s86 = sphi 0, %s83
      %s87 = sphi 0, %s86
      %s103 = sphi 0, %s87
      %s111 = sphi 0, %s113
      %s114 = sphi 0, %s111
      %s115 = sphi 0, %s114
      %s131 = sphi 0, %s115
      %s139 = sphi 0, %s141
      %s142 = sphi 0, %s139
      %s143 = sphi 0, %s142
      %s159 = sphi 0, %s143
      %s167 = sphi 0, %s169
      %s170 = sphi 0, %s167
      %s171 = sphi 0, %s170
      %s187 = sphi 0, %s171
    $region4: #{conv3d_pallas.1} parent=1 // loop_header_branch
      %22 = sbr.rel (%p20) target = $region8
    $region5: #{conv3d_pallas.1} parent=1 // loop_body
      %s24 = ssub.s32 %s19, 1
      %s25 = ssub.s32 %s19, 2
      %s32 = sadd.s32 1, %s27
      %p33 = scmp.ge.s32.totalorder %s32, 4
      %s34 = scalar_select %p33, 0, %s32
      %s35 = sadd.s32 1, %s26
      %s36 = scalar_select %p33, %s35, %s26
      %p37 = scmp.ge.s32.totalorder %s36, 2
      %s38 = scalar_select %p37, 0, %s36
      %s40 = sadd.s32 %s39, 1
      %p43 = scmp.eq.s32.totalorder %s19, 7
      %p44 = scmp.ne.s32.totalorder %s39, %s41
      %p45 = scmp.eq.s32.totalorder %s19, 0
      %p46 = por %p44, %p45
      %p47 = scmp.ne.s32.totalorder %s39, %s41
      %p48 = scmp.eq.s32.totalorder %s24, 7
      %p49 = por %p47, %p48
      %p50 = scmp.ne.s32.totalorder %s41, %s42
      %p51 = scmp.eq.s32.totalorder %s24, 0
      %p52 = por %p50, %p51
      %p53 = scmp.ne.s32.totalorder %s41, %s42
      %p54 = scmp.eq.s32.totalorder %s25, 7
      %p55 = por %p53, %p54
      %p57 = scmp.ne.s32.totalorder %s42, %s56
      %p58 = scmp.eq.s32.totalorder %s25, 0
      %p59 = por %p57, %p58
      %s61 = sadd.s32 %s60, 1
      %p64 = scmp.eq.s32.totalorder %s19, 7
      %p65 = scmp.ne.s32.totalorder %s60, %s62
      %p66 = scmp.eq.s32.totalorder %s19, 0
      %p67 = por %p65, %p66
      %p68 = scmp.ne.s32.totalorder %s60, %s62
      %p69 = scmp.eq.s32.totalorder %s24, 7
      %p70 = por %p68, %p69
      %p71 = scmp.ne.s32.totalorder %s62, %s63
      %p72 = scmp.eq.s32.totalorder %s24, 0
      %p73 = por %p71, %p72
      %p74 = scmp.ne.s32.totalorder %s62, %s63
      %p75 = scmp.eq.s32.totalorder %s25, 7
      %p76 = por %p74, %p75
      %p78 = scmp.ne.s32.totalorder %s63, %s77
      %p79 = scmp.eq.s32.totalorder %s25, 0
      %p80 = por %p78, %p79
      %s81 = ssub.s32 %s27, %s34
      %p82 = scmp.eq.s32.totalorder %s81, 0
      %s84 = sadd.s32 %s83, 1
      %s85 = scalar_select %p82, %s83, %s84
      %p88 = pneg %p82
      %p89 = scmp.eq.s32.totalorder %s19, 7
      %p90 = por %p88, %p89
      %p91 = scmp.ne.s32.totalorder %s83, %s86
      %p92 = scmp.eq.s32.totalorder %s19, 0
      %p93 = por %p91, %p92
      %p94 = scmp.ne.s32.totalorder %s83, %s86
      %p95 = scmp.eq.s32.totalorder %s24, 7
      %p96 = por %p94, %p95
      %p97 = scmp.ne.s32.totalorder %s86, %s87
      %p98 = scmp.eq.s32.totalorder %s24, 0
      %p99 = por %p97, %p98
      %p100 = scmp.ne.s32.totalorder %s86, %s87
      %p101 = scmp.eq.s32.totalorder %s25, 7
      %p102 = por %p100, %p101
      %p104 = scmp.ne.s32.totalorder %s87, %s103
      %p105 = scmp.eq.s32.totalorder %s25, 0
      %p106 = por %p104, %p105
      %s107 = ssub.s32 %s26, %s38
      %s108 = ssub.s32 %s27, %s34
      %s109 = sor.u32 %s107, %s108
      %p110 = scmp.eq.s32.totalorder %s109, 0
      %s112 = sadd.s32 %s111, 1
      %s113 = scalar_select %p110, %s111, %s112
      %p116 = pneg %p110
      %p117 = scmp.eq.s32.totalorder %s19, 7
      %p118 = por %p116, %p117
      %p119 = scmp.ne.s32.totalorder %s111, %s114
      %p120 = scmp.eq.s32.totalorder %s19, 0
      %p121 = por %p119, %p120
      %p122 = scmp.ne.s32.totalorder %s111, %s114
      %p123 = scmp.eq.s32.totalorder %s24, 7
      %p124 = por %p122, %p123
      %p125 = scmp.ne.s32.totalorder %s114, %s115
      %p126 = scmp.eq.s32.totalorder %s24, 0
      %p127 = por %p125, %p126
      %p128 = scmp.ne.s32.totalorder %s114, %s115
      %p129 = scmp.eq.s32.totalorder %s25, 7
      %p130 = por %p128, %p129
      %p132 = scmp.ne.s32.totalorder %s115, %s131
      %p133 = scmp.eq.s32.totalorder %s25, 0
      %p134 = por %p132, %p133
      %s135 = ssub.s32 %s26, %s38
      %s136 = ssub.s32 %s27, %s34
      %s137 = sor.u32 %s135, %s136
      %p138 = scmp.eq.s32.totalorder %s137, 0
      %s140 = sadd.s32 %s139, 1
      %s141 = scalar_select %p138, %s139, %s140
      %p144 = pneg %p138
      %p145 = scmp.eq.s32.totalorder %s19, 7
      %p146 = por %p144, %p145
      %p147 = scmp.ne.s32.totalorder %s139, %s142
      %p148 = scmp.eq.s32.totalorder %s19, 0
      %p149 = por %p147, %p148
      %p150 = scmp.ne.s32.totalorder %s139, %s142
      %p151 = scmp.eq.s32.totalorder %s24, 7
      %p152 = por %p150, %p151
      %p153 = scmp.ne.s32.totalorder %s142, %s143
      %p154 = scmp.eq.s32.totalorder %s24, 0
      %p155 = por %p153, %p154
      %p156 = scmp.ne.s32.totalorder %s142, %s143
      %p157 = scmp.eq.s32.totalorder %s25, 7
      %p158 = por %p156, %p157
      %p160 = scmp.ne.s32.totalorder %s143, %s159
      %p161 = scmp.eq.s32.totalorder %s25, 0
      %p162 = por %p160, %p161
      %s163 = ssub.s32 %s26, %s38
      %s164 = ssub.s32 %s27, %s34
      %s165 = sor.u32 %s163, %s164
      %p166 = scmp.eq.s32.totalorder %s165, 0
      %s168 = sadd.s32 %s167, 1
      %s169 = scalar_select %p166, %s167, %s168
      %p172 = pneg %p166
      %p173 = scmp.eq.s32.totalorder %s19, 7
      %p174 = por %p172, %p173
      %p175 = scmp.ne.s32.totalorder %s167, %s170
      %p176 = scmp.eq.s32.totalorder %s19, 0
      %p177 = por %p175, %p176
      %p178 = scmp.ne.s32.totalorder %s167, %s170
      %p179 = scmp.eq.s32.totalorder %s24, 7
      %p180 = por %p178, %p179
      %p181 = scmp.ne.s32.totalorder %s170, %s171
      %p182 = scmp.eq.s32.totalorder %s24, 0
      %p183 = por %p181, %p182
      %p184 = scmp.ne.s32.totalorder %s170, %s171
      %p185 = scmp.eq.s32.totalorder %s25, 7
      %p186 = por %p184, %p185
      %p188 = scmp.ne.s32.totalorder %s171, %s187
      %p189 = scmp.eq.s32.totalorder %s25, 0
      %p190 = por %p188, %p189
      %p191 = scmp.le.s32.totalorder 1, %s19
      %p192 = scmp.lt.s32.totalorder %s19, 9
      %p193 = pnand %p191, %p192
      %p194 = pneg %p193
      // Predicated region
      $region9: #{conv3d_pallas.1} parent=5 // pred_check
        _
      $region10: #{conv3d_pallas.1} parent=5 // pred_check_branch
        %196 = sbr.rel (%p193) target = $region12
      $region11: #{conv3d_pallas.1} parent=5 // pred_region
        %s197 = ssub.s32 %s19, 1
        // Predicated region
        $region13: #{conv3d_pallas.1} parent=11 // pred_check
          %p198 = pneg %p52
        $region14: #{conv3d_pallas.1} parent=11 // pred_check_branch
          %200 = sbr.rel (%p198) target = $region16
        $region15: #{conv3d_pallas.1} parent=11 // pred_region
          _
        $region16: #{conv3d_pallas.1} parent=11 // pred_fallthru
          _
        // Predicated region
        $region17: #{conv3d_pallas.1} parent=11 // pred_check
          %p201 = pneg %p73
        $region18: #{conv3d_pallas.1} parent=11 // pred_check_branch
          %203 = sbr.rel (%p201) target = $region20
        $region19: #{conv3d_pallas.1} parent=11 // pred_region
          _
        $region20: #{conv3d_pallas.1} parent=11 // pred_fallthru
          _
      $region12: #{conv3d_pallas.1} parent=5 // pred_fallthru
        _
      %p204 = scmp.lt.s32.totalorder %s19, 8
      // Predicated region
      $region21: #{conv3d_pallas.1} parent=5 // pred_check
        %p205 = pneg %p204
      $region22: #{conv3d_pallas.1} parent=5 // pred_check_branch
        %207 = sbr.rel (%p205) target = $region24
      $region23: #{conv3d_pallas.1} parent=5 // pred_region
        // Predicated region
        $region25: #{conv3d_pallas.1} parent=23 // pred_check
          %p208 = pneg %p93
        $region26: #{conv3d_pallas.1} parent=23 // pred_check_branch
          %210 = sbr.rel (%p208) target = $region28
        $region27: #{conv3d_pallas.1} parent=23 // pred_region
          %p211 = scmp.lt.s32.totalorder %s27, 3
          %s212 = scalar_select %p211, %s27, 3
          %s213 = scalar_lea.vmem %s3, %s212
        $region28: #{conv3d_pallas.1} parent=23 // pred_fallthru
          _
      $region24: #{conv3d_pallas.1} parent=5 // pred_fallthru
        _
      %p214 = scmp.le.s32.totalorder 1, %s19
      %p215 = scmp.lt.s32.totalorder %s19, 9
      %p216 = pnand %p214, %p215
      %p217 = pneg %p216
      // Predicated region
      $region29: #{conv3d_pallas.1} parent=5 // pred_check
        _
      $region30: #{conv3d_pallas.1} parent=5 // pred_check_branch
        %219 = sbr.rel (%p216) target = $region32
      $region31: #{conv3d_pallas.1} parent=5 // pred_region
        %s220 = ssub.s32 %s19, 1
        %p221 = pneg %p52
        %p222 = pneg %p49
        %p223 = pneg %p73
        %p224 = pneg %p70
        %p225 = scmp.lt.s32.totalorder %s29, 3
        %s226 = scalar_select %p225, %s29, 3
        %s227 = scalar_lea.vmem %s3, %s226
        %p228 = pneg %p99
        %p229 = pneg %p96
        %p230 = pneg %p127
        %p231 = pneg %p124
        %p232 = scmp.lt.s32.totalorder %s28, 1
        %s233 = scalar_select %p232, %s28, 1
        %p234 = scmp.lt.s32.totalorder %s29, 3
        %s235 = scalar_select %p234, %s29, 3
        %s236 = smul.addr %s233, 4
        %s237 = sadd.s32 %s235, %s236
        %s238 = smul.addr %s237, 2
        %s239 = scalar_lea.vmem %s4, %s238
        %p240 = pneg %p155
        %p241 = pneg %p152
        %s242 = sand.u32 %s142, 1
        %s243 = scalar_lea.sflag [#allocation6], %s242
        %s244 = sand.u32 %s142, 1
        %s245 = smul.addr %s244, 2
        %s246 = scalar_lea.vmem [#allocation5], %s245
        %p247 = pneg %p183
        %p248 = pneg %p180
        %s249 = sand.u32 %s170, 1
        %s250 = scalar_lea.sflag [#allocation8], %s249
        %s251 = sand.u32 %s170, 1
        %s252 = smul.addr %s251, 2
        %s253 = scalar_lea.vmem [#allocation7], %s252
        %p254 = scmp.lt.s32.totalorder %s29, 3
        %s255 = scalar_select %p254, %s29, 3
        %s256 = scalar_lea.vmem %s3, %s255
        %p257 = scmp.lt.s32.totalorder %s28, 1
        %s258 = scalar_select %p257, %s28, 1
        %p259 = scmp.lt.s32.totalorder %s29, 3
        %s260 = scalar_select %p259, %s29, 3
        %s261 = smul.addr %s258, 4
        %s262 = sadd.s32 %s260, %s261
        %s263 = smul.addr %s262, 2
        %s264 = scalar_lea.vmem %s4, %s263
        %s265 = smul.u32 %s28, 4
        %s266 = sadd.s32 %s265, %s29
        %s267 = sand.u32 %s266, 1
        %p268 = scmp.eq.s32.totalorder %s266, 0
        // Predicated region
        $region33: #{conv3d_pallas.1} parent=31 // pred_check
          %p269 = pneg %p268
        $region34: #{conv3d_pallas.1} parent=31 // pred_check_branch
          %271 = sbr.rel (%p269) target = $region36
        $region35: #{conv3d_pallas.1} parent=31 // pred_region
          %s272 = smul.u32 %s29, 128
          %s273 = sshra.s32 %s272, 7
          %s274 = sand.u32 %s272, 127
          %s275 = smul.u32 %s28, 6
          %s276 = sadd.s32 %s273, %s275
          %s277 = smul.addr %s276, 4
          %s278 = scalar_lea.vmem %s0, %s277
          %p280 = scmp.lt.u32.totalorder 12, 8
          %p281 = pneg %p280
          // Predicated region
          $region37: #{conv3d_pallas.1} parent=35 // pred_check
            _
          $region38: #{conv3d_pallas.1} parent=35 // pred_check_branch
            %283 = sbr.rel (%p280) target = $region40
          $region39: #{conv3d_pallas.1} parent=35 // pred_region
            %s298 = sand.u32 12, 7
            %p299 = scmp.eq.s32.totalorder %s298, 0
            %p300 = pneg %p299
            // Predicated region
            $region52: #{conv3d_pallas.1} parent=39 // pred_check
              _
            $region53: #{conv3d_pallas.1} parent=39 // pred_check_branch
              %302 = sbr.rel (%p299) target = $region55
            $region54: #{conv3d_pallas.1} parent=39 // pred_region
              %s303 = sand.u32 12, 7
              %s304 = ssub.s32 12, %s303
              %s305 = scalar_lea.vmem %s278, %s304
              %s306 = ssub.s32 12, %s303
              %s307 = scalar_lea.vmem [#allocation2], %s306
              loop: start=0, step=1, limit=1
              $region56: #{conv3d_pallas.1} parent=54 // loop_pre_header
                _
              $region57: #{conv3d_pallas.1} parent=54 // loop_header
                %s309 = sphi 0, %s313
                %p310 = scmp.ge.s32.totalorder %s309, 1
                %s314 = sphi %s278, %s278
                %s315 = sphi [#allocation2], [#allocation2]
              $region58: #{conv3d_pallas.1} parent=54 // loop_header_branch
                %312 = sbr.rel (%p310) target = $region62
              $region59: #{conv3d_pallas.1} parent=54 // loop_body
                %v316 = vld [vmem:[%s314] sm:$0xff]
                %317 = vst [vmem:[%s315] sm:$0xff] %v316
              $region60: #{conv3d_pallas.1} parent=54 // loop_footer
                %s313 = sadd.s32 1, %s309
              $region61: #{conv3d_pallas.1} parent=54 // loop_footer_branch
                %308 = sbr.rel target = $region57
              $region62: #{conv3d_pallas.1} parent=54 // loop_exit
                _
              %s318 = sshllo.u32 0, %s303
              loop: start=0, step=1, limit=1
              $region63: #{conv3d_pallas.1} parent=54 // loop_pre_header
                _
              $region64: #{conv3d_pallas.1} parent=54 // loop_header
                %s320 = sphi 0, %s324
                %p321 = scmp.ge.s32.totalorder %s320, 1
                %s325 = sphi %s305, %s305
                %s326 = sphi %s307, %s307
              $region65: #{conv3d_pallas.1} parent=54 // loop_header_branch
                %323 = sbr.rel (%p321) target = $region69
              $region66: #{conv3d_pallas.1} parent=54 // loop_body
                %v327 = vld [vmem:[%s325] sm:%s318]
                %328 = vst [vmem:[%s326] sm:%s318] %v327
              $region67: #{conv3d_pallas.1} parent=54 // loop_footer
                %s324 = sadd.s32 1, %s320
              $region68: #{conv3d_pallas.1} parent=54 // loop_footer_branch
                %319 = sbr.rel target = $region64
              $region69: #{conv3d_pallas.1} parent=54 // loop_exit
                _
            $region55: #{conv3d_pallas.1} parent=39 // pred_fallthru
              _
          $region40: #{conv3d_pallas.1} parent=35 // pred_fallthru
            _
          // Predicated region
          $region41: #{conv3d_pallas.1} parent=35 // pred_check
            %p284 = pneg %p280
          $region42: #{conv3d_pallas.1} parent=35 // pred_check_branch
            %286 = sbr.rel (%p284) target = $region44
          $region43: #{conv3d_pallas.1} parent=35 // pred_region
            %s287 = sshllo.u32 0, 12
            loop: start=0, step=1, limit=1
            $region45: #{conv3d_pallas.1} parent=43 // loop_pre_header
              _
            $region46: #{conv3d_pallas.1} parent=43 // loop_header
              %s289 = sphi 0, %s293
              %p290 = scmp.ge.s32.totalorder %s289, 1
              %s294 = sphi %s278, %s278
              %s295 = sphi [#allocation2], [#allocation2]
            $region47: #{conv3d_pallas.1} parent=43 // loop_header_branch
              %292 = sbr.rel (%p290) target = $region51
            $region48: #{conv3d_pallas.1} parent=43 // loop_body
              %v296 = vld [vmem:[%s294] sm:%s287]
              %297 = vst [vmem:[%s295] sm:%s287] %v296
            $region49: #{conv3d_pallas.1} parent=43 // loop_footer
              %s293 = sadd.s32 1, %s289
            $region50: #{conv3d_pallas.1} parent=43 // loop_footer_branch
              %288 = sbr.rel target = $region46
            $region51: #{conv3d_pallas.1} parent=43 // loop_exit
              _
          $region44: #{conv3d_pallas.1} parent=35 // pred_fallthru
            _
          // Predicated region
          $region70: #{conv3d_pallas.1} parent=35 // pred_check
            _
          $region71: #{conv3d_pallas.1} parent=35 // pred_check_branch
            %331 = sbr.rel (0) target = $region73
          $region72: #{conv3d_pallas.1} parent=35 // pred_region
            %332 = vsyncadd [#allocation4], 192
          $region73: #{conv3d_pallas.1} parent=35 // pred_fallthru
            _
        $region36: #{conv3d_pallas.1} parent=31 // pred_fallthru
          _
        %s333 = smul.u32 %s29, 128
        %s334 = smul.u32 %s267, 3
        %s335 = smul.addr %s334, 4
        %s336 = scalar_lea.vmem [#allocation2], %s335
        %s337 = scalar_lea.sflag [#allocation4], %s267
        %s338 = smul.u32 4, 1
        %s339 = smul.u32 %s338, 3
        %s340 = sshll.u32 %s339, 4
        %341 = dma.done %s337, %s340
        %s342 = sadd.s32 %s266, 1
        %p343 = scmp.lt.s32.totalorder %s342, 8
        // Predicated region
        $region74: #{conv3d_pallas.1} parent=31 // pred_check
          %p344 = pneg %p343
        $region75: #{conv3d_pallas.1} parent=31 // pred_check_branch
          %346 = sbr.rel (%p344) target = $region77
        $region76: #{conv3d_pallas.1} parent=31 // pred_region
          %s347 = sadd.s32 %s29, 1
          %p348 = scmp.lt.s32.totalorder %s347, 4
          %s349 = scalar_select %p348, %s347, 0
          %s350 = sadd.s32 %s28, 1
          %s351 = scalar_select %p348, %s28, %s350
          %s352 = ssub.s32 1, %s267
          %s353 = smul.u32 %s349, 128
          %s354 = sshra.s32 %s353, 7
          %s355 = sand.u32 %s353, 127
          %s356 = smul.u32 %s351, 6
          %s357 = sadd.s32 %s354, %s356
          %s358 = smul.addr %s357, 4
          %s359 = scalar_lea.vmem %s0, %s358
          %s360 = smul.u32 %s352, 3
          %s361 = smul.addr %s360, 4
          %s362 = scalar_lea.vmem [#allocation2], %s361
          %s363 = scalar_lea.sflag [#allocation4], %s352
          %p365 = scmp.lt.u32.totalorder 12, 8
          %p366 = pneg %p365
          // Predicated region
          $region78: #{conv3d_pallas.1} parent=76 // pred_check
            _
          $region79: #{conv3d_pallas.1} parent=76 // pred_check_branch
            %368 = sbr.rel (%p365) target = $region81
          $region80: #{conv3d_pallas.1} parent=76 // pred_region
            %s383 = sand.u32 12, 7
            %p384 = scmp.eq.s32.totalorder %s383, 0
            %p385 = pneg %p384
            // Predicated region
            $region93: #{conv3d_pallas.1} parent=80 // pred_check
              _
            $region94: #{conv3d_pallas.1} parent=80 // pred_check_branch
              %387 = sbr.rel (%p384) target = $region96
            $region95: #{conv3d_pallas.1} parent=80 // pred_region
              %s388 = sand.u32 12, 7
              %s389 = ssub.s32 12, %s388
              %s390 = scalar_lea.vmem %s359, %s389
              %s391 = ssub.s32 12, %s388
              %s392 = scalar_lea.vmem %s362, %s391 [#allocation2]
              loop: start=0, step=1, limit=1
              $region97: #{conv3d_pallas.1} parent=95 // loop_pre_header
                _
              $region98: #{conv3d_pallas.1} parent=95 // loop_header
                %s394 = sphi 0, %s398
                %p395 = scmp.ge.s32.totalorder %s394, 1
                %s399 = sphi %s359, %s359
                %s400 = sphi %s362, %s362
              $region99: #{conv3d_pallas.1} parent=95 // loop_header_branch
                %397 = sbr.rel (%p395) target = $region103
              $region100: #{conv3d_pallas.1} parent=95 // loop_body
                %v401 = vld [vmem:[%s399] sm:$0xff]
                %402 = vst [vmem:[%s400] sm:$0xff] %v401
              $region101: #{conv3d_pallas.1} parent=95 // loop_footer
                %s398 = sadd.s32 1, %s394
              $region102: #{conv3d_pallas.1} parent=95 // loop_footer_branch
                %393 = sbr.rel target = $region98
              $region103: #{conv3d_pallas.1} parent=95 // loop_exit
                _
              %s403 = sshllo.u32 0, %s388
              loop: start=0, step=1, limit=1
              $region104: #{conv3d_pallas.1} parent=95 // loop_pre_header
                _
              $region105: #{conv3d_pallas.1} parent=95 // loop_header
                %s405 = sphi 0, %s409
                %p406 = scmp.ge.s32.totalorder %s405, 1
                %s410 = sphi %s390, %s390
                %s411 = sphi %s392, %s392
              $region106: #{conv3d_pallas.1} parent=95 // loop_header_branch
                %408 = sbr.rel (%p406) target = $region110
              $region107: #{conv3d_pallas.1} parent=95 // loop_body
                %v412 = vld [vmem:[%s410] sm:%s403]
                %413 = vst [vmem:[%s411] sm:%s403] %v412
              $region108: #{conv3d_pallas.1} parent=95 // loop_footer
                %s409 = sadd.s32 1, %s405
              $region109: #{conv3d_pallas.1} parent=95 // loop_footer_branch
                %404 = sbr.rel target = $region105
              $region110: #{conv3d_pallas.1} parent=95 // loop_exit
                _
            $region96: #{conv3d_pallas.1} parent=80 // pred_fallthru
              _
          $region81: #{conv3d_pallas.1} parent=76 // pred_fallthru
            _
          // Predicated region
          $region82: #{conv3d_pallas.1} parent=76 // pred_check
            %p369 = pneg %p365
          $region83: #{conv3d_pallas.1} parent=76 // pred_check_branch
            %371 = sbr.rel (%p369) target = $region85
          $region84: #{conv3d_pallas.1} parent=76 // pred_region
            %s372 = sshllo.u32 0, 12
            loop: start=0, step=1, limit=1
            $region86: #{conv3d_pallas.1} parent=84 // loop_pre_header
              _
            $region87: #{conv3d_pallas.1} parent=84 // loop_header
              %s374 = sphi 0, %s378
              %p375 = scmp.ge.s32.totalorder %s374, 1
              %s379 = sphi %s359, %s359
              %s380 = sphi %s362, %s362
            $region88: #{conv3d_pallas.1} parent=84 // loop_header_branch
              %377 = sbr.rel (%p375) target = $region92
            $region89: #{conv3d_pallas.1} parent=84 // loop_body
              %v381 = vld [vmem:[%s379] sm:%s372]
              %382 = vst [vmem:[%s380] sm:%s372] %v381
            $region90: #{conv3d_pallas.1} parent=84 // loop_footer
              %s378 = sadd.s32 1, %s374
            $region91: #{conv3d_pallas.1} parent=84 // loop_footer_branch
              %373 = sbr.rel target = $region87
            $region92: #{conv3d_pallas.1} parent=84 // loop_exit
              _
          $region85: #{conv3d_pallas.1} parent=76 // pred_fallthru
            _
          // Predicated region
          $region111: #{conv3d_pallas.1} parent=76 // pred_check
            _
          $region112: #{conv3d_pallas.1} parent=76 // pred_check_branch
            %416 = sbr.rel (0) target = $region114
          $region113: #{conv3d_pallas.1} parent=76 // pred_region
            %417 = vsyncadd %s363, 192
          $region114: #{conv3d_pallas.1} parent=76 // pred_fallthru
            _
        $region77: #{conv3d_pallas.1} parent=31 // pred_fallthru
          _
        %v418 = vld [vmem:[%s336] sm:$0xff]
        %v420 = vcombine.high %v418, %v418
        %421 = vrot.lane.b32.xlu0 %v418, 82
        %v422 = vpop.permute.xlu0 %421
        %423 = vrot.lane.b32.xlu0 %v420, 82
        %v424 = vpop.permute.xlu0 %423
        %vm425 = vcmask 670720
        %v426 = vsel %vm425, %v422, %v424
        %428 = vst [vmem:[#allocation3] sm:$0xf] %v426
        %v429 = vld [vmem:[%s336] sm:$0xff]
        %v431 = vcombine.high %v429, %v429
        %432 = vrot.lane.b32.xlu0 %v429, 81
        %v433 = vpop.permute.xlu0 %432
        %434 = vrot.lane.b32.xlu0 %v431, 81
        %v435 = vpop.permute.xlu0 %434
        %vm436 = vcmask 662528
        %v437 = vsel %vm436, %v433, %v435
        %439 = vst [vmem:[#allocation3 + $0x4] sm:$0xf] %v437
        %v440 = vld [vmem:[%s336] sm:$0xff]
        %v442 = vcombine.high %v440, %v440
        %443 = vrot.lane.b32.xlu0 %v440, 80
        %v444 = vpop.permute.xlu0 %443
        %445 = vrot.lane.b32.xlu0 %v442, 80
        %v446 = vpop.permute.xlu0 %445
        %vm447 = vcmask 654336
        %v448 = vsel %vm447, %v444, %v446
        %450 = vst [vmem:[#allocation3 + $0x8] sm:$0xf] %v448
        %v451 = vld [vmem:[%s336] sm:$0xff]
        %v453 = vcombine.high %v451, %v451
        %454 = vrot.lane.b32.xlu0 %v451, 73
        %v455 = vpop.permute.xlu0 %454
        %456 = vrot.lane.b32.xlu0 %v453, 73
        %v457 = vpop.permute.xlu0 %456
        %vm458 = vcmask 596992
        %v459 = vsel %vm458, %v455, %v457
        %461 = vst [vmem:[#allocation3 + $0xc] sm:$0xf] %v459
        %v462 = vld [vmem:[%s336] sm:$0xff]
        %v464 = vcombine.high %v462, %v462
        %465 = vrot.lane.b32.xlu0 %v462, 72
        %v466 = vpop.permute.xlu0 %465
        %467 = vrot.lane.b32.xlu0 %v464, 72
        %v468 = vpop.permute.xlu0 %467
        %vm469 = vcmask 588800
        %v470 = vsel %vm469, %v466, %v468
        %472 = vst [vmem:[#allocation3 + $0x10] sm:$0xf] %v470
        %v473 = vld [vmem:[%s336] sm:$0xff]
        %v475 = vcombine.high %v473, %v473
        %476 = vrot.lane.b32.xlu0 %v473, 71
        %v477 = vpop.permute.xlu0 %476
        %478 = vrot.lane.b32.xlu0 %v475, 71
        %v479 = vpop.permute.xlu0 %478
        %vm480 = vcmask 580608
        %v481 = vsel %vm480, %v477, %v479
        %483 = vst [vmem:[#allocation3 + $0x14] sm:$0xf] %v481
        %v484 = vld [vmem:[%s336] sm:$0xff]
        %v486 = vcombine.high %v484, %v484
        %487 = vrot.lane.b32.xlu0 %v484, 64
        %v488 = vpop.permute.xlu0 %487
        %489 = vrot.lane.b32.xlu0 %v486, 64
        %v490 = vpop.permute.xlu0 %489
        %vm491 = vcmask 523264
        %v492 = vsel %vm491, %v488, %v490
        %494 = vst [vmem:[#allocation3 + $0x18] sm:$0xf] %v492
        %v495 = vld [vmem:[%s336] sm:$0xff]
        %v497 = vcombine.high %v495, %v495
        %498 = vrot.lane.b32.xlu0 %v495, 63
        %v499 = vpop.permute.xlu0 %498
        %500 = vrot.lane.b32.xlu0 %v497, 63
        %v501 = vpop.permute.xlu0 %500
        %vm502 = vcmask 515072
        %v503 = vsel %vm502, %v499, %v501
        %505 = vst [vmem:[#allocation3 + $0x1c] sm:$0xf] %v503
        %v506 = vld [vmem:[%s336] sm:$0xff]
        %v508 = vcombine.high %v506, %v506
        %509 = vrot.lane.b32.xlu0 %v506, 62
        %v510 = vpop.permute.xlu0 %509
        %511 = vrot.lane.b32.xlu0 %v508, 62
        %v512 = vpop.permute.xlu0 %511
        %vm513 = vcmask 506880
        %v514 = vsel %vm513, %v510, %v512
        %516 = vst [vmem:[#allocation3 + $0x20] sm:$0xf] %v514
        %v517 = vld [vmem:[%s336] sm:$0xff]
        %v519 = vcombine.high %v517, %v517
        %520 = vrot.lane.b32.xlu0 %v517, 10
        %v521 = vpop.permute.xlu0 %520
        %522 = vrot.lane.b32.xlu0 %v519, 10
        %v523 = vpop.permute.xlu0 %522
        %vm524 = vcmask 80896
        %v525 = vsel %vm524, %v521, %v523
        %527 = vst [vmem:[#allocation3 + $0x24] sm:$0xf] %v525
        %v528 = vld [vmem:[%s336] sm:$0xff]
        %v530 = vcombine.high %v528, %v528
        %531 = vrot.lane.b32.xlu0 %v528, 9
        %v532 = vpop.permute.xlu0 %531
        %533 = vrot.lane.b32.xlu0 %v530, 9
        %v534 = vpop.permute.xlu0 %533
        %vm535 = vcmask 72704
        %v536 = vsel %vm535, %v532, %v534
        %538 = vst [vmem:[#allocation3 + $0x28] sm:$0xf] %v536
        %v539 = vld [vmem:[%s336] sm:$0xff]
        %v541 = vcombine.high %v539, %v539
        %542 = vrot.lane.b32.xlu0 %v539, 8
        %v543 = vpop.permute.xlu0 %542
        %544 = vrot.lane.b32.xlu0 %v541, 8
        %v545 = vpop.permute.xlu0 %544
        %vm546 = vcmask 64512
        %v547 = vsel %vm546, %v543, %v545
        %549 = vst [vmem:[#allocation3 + $0x2c] sm:$0xf] %v547
        %v550 = vld [vmem:[%s336] sm:$0xff]
        %v552 = vcombine.high %v550, %v550
        %553 = vrot.lane.b32.xlu0 %v550, 1
        %v554 = vpop.permute.xlu0 %553
        %555 = vrot.lane.b32.xlu0 %v552, 1
        %v556 = vpop.permute.xlu0 %555
        %vm557 = vcmask 7168
        %v558 = vsel %vm557, %v554, %v556
        %560 = vst [vmem:[#allocation3 + $0x30] sm:$0xf] %v558
        %v561 = vld [vmem:[%s336 + $0x4] sm:$0xf]
        %562 = vst [vmem:[#allocation3 + $0x34] sm:$0xf] %v561
        %v563 = vld [vmem:[%s336 + $0x4] sm:$0xff]
        %v565 = vcombine.high %v563, %v563
        %566 = vrot.lane.b32.xlu0 %v563, 127
        %v567 = vpop.permute.xlu0 %566
        %568 = vrot.lane.b32.xlu0 %v565, 127
        %v569 = vpop.permute.xlu0 %568
        %vm570 = vcmask 1039360
        %v571 = vsel %vm570, %v567, %v569
        %573 = vst [vmem:[#allocation3 + $0x38] sm:$0xf] %v571
        %v574 = vld [vmem:[%s336 + $0x4] sm:$0xff]
        %v576 = vcombine.high %v574, %v574
        %577 = vrot.lane.b32.xlu0 %v574, 120
        %v578 = vpop.permute.xlu0 %577
        %579 = vrot.lane.b32.xlu0 %v576, 120
        %v580 = vpop.permute.xlu0 %579
        %vm581 = vcmask 982016
        %v582 = vsel %vm581, %v578, %v580
        %584 = vst [vmem:[#allocation3 + $0x3c] sm:$0xf] %v582
        %v585 = vld [vmem:[%s336 + $0x4] sm:$0xff]
        %v587 = vcombine.high %v585, %v585
        %588 = vrot.lane.b32.xlu0 %v585, 119
        %v589 = vpop.permute.xlu0 %588
        %590 = vrot.lane.b32.xlu0 %v587, 119
        %v591 = vpop.permute.xlu0 %590
        %vm592 = vcmask 973824
        %v593 = vsel %vm592, %v589, %v591
        %595 = vst [vmem:[#allocation3 + $0x40] sm:$0xf] %v593
        %v596 = vld [vmem:[%s336 + $0x4] sm:$0xff]
        %v598 = vcombine.high %v596, %v596
        %599 = vrot.lane.b32.xlu0 %v596, 118
        %v600 = vpop.permute.xlu0 %599
        %601 = vrot.lane.b32.xlu0 %v598, 118
        %v602 = vpop.permute.xlu0 %601
        %vm603 = vcmask 965632
        %v604 = vsel %vm603, %v600, %v602
        %606 = vst [vmem:[#allocation3 + $0x44] sm:$0xf] %v604
        %v607 = vld [vmem:[%s336 + $0x4] sm:$0xff]
        %v609 = vcombine.high %v607, %v607
        %610 = vrot.lane.b32.xlu0 %v607, 66
        %v611 = vpop.permute.xlu0 %610
        %612 = vrot.lane.b32.xlu0 %v609, 66
        %v613 = vpop.permute.xlu0 %612
        %vm614 = vcmask 539648
        %v615 = vsel %vm614, %v611, %v613
        %617 = vst [vmem:[#allocation3 + $0x48] sm:$0xf] %v615
        %v618 = vld [vmem:[%s336 + $0x4] sm:$0xff]
        %v620 = vcombine.high %v618, %v618
        %621 = vrot.lane.b32.xlu0 %v618, 65
        %v622 = vpop.permute.xlu0 %621
        %623 = vrot.lane.b32.xlu0 %v620, 65
        %v624 = vpop.permute.xlu0 %623
        %vm625 = vcmask 531456
        %v626 = vsel %vm625, %v622, %v624
        %628 = vst [vmem:[#allocation3 + $0x4c] sm:$0xf] %v626
        %v629 = vld [vmem:[%s336 + $0x4] sm:$0xff]
        %v631 = vcombine.high %v629, %v629
        %632 = vrot.lane.b32.xlu0 %v629, 64
        %v633 = vpop.permute.xlu0 %632
        %634 = vrot.lane.b32.xlu0 %v631, 64
        %v635 = vpop.permute.xlu0 %634
        %v636 = vsel %vm491, %v633, %v635
        %638 = vst [vmem:[#allocation3 + $0x50] sm:$0xf] %v636
        %v639 = vld [vmem:[%s336 + $0x4] sm:$0xff]
        %v641 = vcombine.high %v639, %v639
        %642 = vrot.lane.b32.xlu0 %v639, 57
        %v643 = vpop.permute.xlu0 %642
        %644 = vrot.lane.b32.xlu0 %v641, 57
        %v645 = vpop.permute.xlu0 %644
        %vm646 = vcmask 465920
        %v647 = vsel %vm646, %v643, %v645
        %649 = vst [vmem:[#allocation3 + $0x54] sm:$0xf] %v647
        %v650 = vld [vmem:[%s336 + $0x4] sm:$0xff]
        %v652 = vcombine.high %v650, %v650
        %653 = vrot.lane.b32.xlu0 %v650, 56
        %v654 = vpop.permute.xlu0 %653
        %655 = vrot.lane.b32.xlu0 %v652, 56
        %v656 = vpop.permute.xlu0 %655
        %vm657 = vcmask 457728
        %v658 = vsel %vm657, %v654, %v656
        %660 = vst [vmem:[#allocation3 + $0x58] sm:$0xf] %v658
        %v661 = vld [vmem:[%s336 + $0x4] sm:$0xff]
        %v663 = vcombine.high %v661, %v661
        %664 = vrot.lane.b32.xlu0 %v661, 55
        %v665 = vpop.permute.xlu0 %664
        %666 = vrot.lane.b32.xlu0 %v663, 55
        %v667 = vpop.permute.xlu0 %666
        %vm668 = vcmask 449536
        %v669 = vsel %vm668, %v665, %v667
        %671 = vst [vmem:[#allocation3 + $0x5c] sm:$0xf] %v669
        %v672 = vld [vmem:[%s336 + $0x4] sm:$0xff]
        %v674 = vcombine.high %v672, %v672
        %675 = vrot.lane.b32.xlu0 %v672, 48
        %v676 = vpop.permute.xlu0 %675
        %677 = vrot.lane.b32.xlu0 %v674, 48
        %v678 = vpop.permute.xlu0 %677
        %vm679 = vcmask 392192
        %v680 = vsel %vm679, %v676, %v678
        %682 = vst [vmem:[#allocation3 + $0x60] sm:$0xf] %v680
        %v683 = vld [vmem:[%s336 + $0x4] sm:$0xff]
        %v685 = vcombine.high %v683, %v683
        %686 = vrot.lane.b32.xlu0 %v683, 47
        %v687 = vpop.permute.xlu0 %686
        %688 = vrot.lane.b32.xlu0 %v685, 47
        %v689 = vpop.permute.xlu0 %688
        %vm690 = vcmask 384000
        %v691 = vsel %vm690, %v687, %v689
        %693 = vst [vmem:[#allocation3 + $0x64] sm:$0xf] %v691
        %v694 = vld [vmem:[%s336 + $0x4] sm:$0xff]
        %v696 = vcombine.high %v694, %v694
        %697 = vrot.lane.b32.xlu0 %v694, 46
        %v698 = vpop.permute.xlu0 %697
        %699 = vrot.lane.b32.xlu0 %v696, 46
        %v700 = vpop.permute.xlu0 %699
        %vm701 = vcmask 375808
        %v702 = vsel %vm701, %v698, %v700
        %704 = vst [vmem:[#allocation3 + $0x68] sm:$0xf] %v702
        %v705 = vld [vmem:[%s1] sm:$0x3]
        %v706 = vld [vmem:[#allocation3] sm:$0xff]
        %v707 = vld [vmem:[#allocation3 + $0x8] sm:$0xff]
        %v708 = vld [vmem:[#allocation3 + $0x10] sm:$0xff]
        %v709 = vld [vmem:[#allocation3 + $0x18] sm:$0xff]
        %v710 = vld [vmem:[#allocation3 + $0x20] sm:$0xff]
        %v711 = vld [vmem:[#allocation3 + $0x28] sm:$0xff]
        %v712 = vld [vmem:[#allocation3 + $0x30] sm:$0xff]
        %v713 = vld [vmem:[#allocation3 + $0x38] sm:$0xff]
        %v714 = vld [vmem:[#allocation3 + $0x40] sm:$0xff]
        %v715 = vld [vmem:[#allocation3 + $0x48] sm:$0xff]
        %v716 = vld [vmem:[#allocation3 + $0x50] sm:$0xff]
        %v717 = vld [vmem:[#allocation3 + $0x58] sm:$0xff]
        %v718 = vld [vmem:[#allocation3 + $0x60] sm:$0xff]
        %v719 = vld [vmem:[#allocation3 + $0x68] sm:$0xf]
        %vm720 = vcmask 883712
        %v722 = vsel %vm720, %v705, 0
        %vm724 = vcmask 1043456
        %v726 = vsel %vm724, %v719, 0
        %728 = vmatprep.subr.mxu0 0.0
        %729 = vmatpush1.msra.mxu0 %v706
        %730 = vmatprep.subr.mxu0 0.0
        %731 = vmatpush1.msra.mxu0 %v707
        %732 = vmatprep.subr.mxu0 0.0
        %733 = vmatpush1.msra.mxu0 %v708
        %734 = vmatprep.subr.mxu0 0.0
        %735 = vmatpush1.msra.mxu0 %v709
        %736 = vmatprep.subr.mxu0 0.0
        %737 = vmatpush1.msra.mxu0 %v710
        %738 = vmatprep.subr.mxu0 0.0
        %739 = vmatpush1.msra.mxu0 %v711
        %740 = vmatprep.subr.mxu0 0.0
        %741 = vmatpush1.msra.mxu0 %v712
        %742 = vmatprep.subr.mxu0 0.0
        %743 = vmatpush1.msra.mxu0 %v713
        %744 = vmatprep.subr.mxu0 0.0
        %745 = vmatpush1.msra.mxu0 %v714
        %746 = vmatprep.subr.mxu0 0.0
        %747 = vmatpush1.msra.mxu0 %v715
        %748 = vmatprep.subr.mxu0 0.0
        %749 = vmatpush1.msra.mxu0 %v716
        %750 = vmatprep.subr.mxu0 0.0
        %751 = vmatpush1.msra.mxu0 %v717
        %752 = vmatprep.subr.mxu0 0.0
        %753 = vmatpush1.msra.mxu0 %v718
        %754 = vmatprep.subr.mxu0 0.0
        %755 = vmatpush1.msra.mxu0 %v726
        %756 = vmatprep.subr.mxu0 0.0
        %757 = vmatpush1.msra.mxu0 0.0
        %758 = vmatprep.subr.mxu0 0.0
        %759 = vmatpush1.msra.mxu0 0.0
        %760 = vmatprep.subr.mxu0 0.0
        %761 = vmatpush1.msra.mxu0 0.0
        %762 = vmatprep.subr.mxu0 0.0
        %763 = vmatpush1.msra.mxu0 0.0
        %764 = vmatprep.subr.mxu0 0.0
        %765 = vmatpush1.msra.mxu0 0.0
        %766 = vmatprep.subr.mxu0 0.0
        %767 = vmatpush1.msra.mxu0 0.0
        %768 = vmatprep.subr.mxu0 0.0
        %769 = vmatpush1.msra.mxu0 0.0
        %770 = vmatprep.subr.mxu0 0.0
        %771 = vmatpush1.msra.mxu0 0.0
        %772 = vmatprep.subr.mxu0 0.0
        %773 = vmatpush1.msra.mxu0 0.0
        %774 = vmatprep.subr.mxu0 0.0
        %775 = vmatpush1.msra.mxu0 0.0
        %776 = vmatprep.subr.mxu0 0.0
        %777 = vmatpush1.msra.mxu0 0.0
        %778 = vmatprep.subr.mxu0 0.0
        %779 = vmatpush1.msra.mxu0 0.0
        %780 = vmatprep.subr.mxu0 0.0
        %781 = vmatpush1.msra.mxu0 0.0
        %782 = vmatprep.subr.mxu0 0.0
        %783 = vmatpush1.msra.mxu0 0.0
        %784 = vmatprep.subr.mxu0 0.0
        %785 = vmatpush1.msra.mxu0 0.0
        %786 = vmatprep.subr.mxu0 0.0
        %787 = vmatpush1.msra.mxu0 0.0
        %788 = vmatprep.subr.mxu0 0.0
        %789 = vmatpush1.msra.mxu0 0.0
        %790 = vmatprep.subr.mxu0 0.0
        %791 = vmatpush1.msra.mxu0 0.0
        %792 = vmatprep.mubr.f32.mxu0 0.0
        %793 = vmatmul.mubr.f32.gmra.mrb[0].mxu0 %v722
        %v794 = vpop.f32.mrb[0].mxu0
        %v795 = vadd.f32 0.0, %v794
        %v796 = vpop.f32.mrb[0].mxu0
        %797 = vdwg.mxu0
        %v798 = vld [vmem:[%s256] sm:$0x1]
        %v800 = vlaneseq
        %v801 = vshrl.u32 %v800, 7
        %v802 = vsub.s32 0, %v801
        %v803 = vrot.slane %v798, %v802
        %v805 = vmul.f32 %v795, %v803
        %vm806 = vcmask 1041408
        %v807 = vsel %vm806, %v805, 0.0
        %808 = vadd.xlane.f32.xlu0 %v807
        %v809 = vpop.xlane.xlu0 %808
        %vm810 = vcmask 1024
        %811 = vst.msk [vmem:[%s246] sm:$0x3] %vm810, %v809
        %v812 = vmul.f32 %v805, %v805
        %v813 = vsel %vm806, %v812, 0.0
        %814 = vadd.xlane.f32.xlu0 %v813
        %v815 = vpop.xlane.xlu0 %814
        %816 = vst.msk [vmem:[%s253] sm:$0x3] %vm810, %v815
        %v817 = vld [vmem:[%s2] sm:$0x3]
        %819 = vset.pattern.permute.xlu0 0
        %820 = vperm.xlu0 %819, %v817
        %v821 = vpop.permute.xlu0 %820
        %v823 = vmul.f32 %v821, %v803
        %v824 = vadd.f32 %v805, %v823
        %825 = vst [vmem:[%s264] sm:$0x3] %v824
        %p826 = scmp.lt.s32.totalorder %s28, 1
        %s827 = scalar_select %p826, %s28, 1
        %p828 = scmp.lt.s32.totalorder %s29, 3
        %s829 = scalar_select %p828, %s29, 3
        %s830 = smul.addr %s827, 4
        %s831 = sadd.s32 %s829, %s830
        %s832 = smul.addr %s831, 2
        %s833 = scalar_lea.vmem %s4, %s832
        %s834 = sand.u32 %s142, 1
        %s835 = scalar_lea.sflag [#allocation6], %s834
        %s836 = sand.u32 %s142, 1
        %s837 = smul.addr %s836, 2
        %s838 = scalar_lea.vmem [#allocation5], %s837
        %s839 = sand.u32 %s170, 1
        %s840 = scalar_lea.sflag [#allocation8], %s839
        %s841 = sand.u32 %s170, 1
        %s842 = smul.addr %s841, 2
        %s843 = scalar_lea.vmem [#allocation7], %s842
        // Predicated region
        $region115: #{conv3d_pallas.1} parent=31 // pred_check
          %p844 = pneg %p124
        $region116: #{conv3d_pallas.1} parent=31 // pred_check_branch
          %846 = sbr.rel (%p844) target = $region118
        $region117: #{conv3d_pallas.1} parent=31 // pred_region
          _
        $region118: #{conv3d_pallas.1} parent=31 // pred_fallthru
          _
        // Predicated region
        $region119: #{conv3d_pallas.1} parent=31 // pred_check
          %p847 = pneg %p152
        $region120: #{conv3d_pallas.1} parent=31 // pred_check_branch
          %849 = sbr.rel (%p847) target = $region122
        $region121: #{conv3d_pallas.1} parent=31 // pred_region
          %s851 = ssub.s32 32, 32
          %852 = vsyncadd %s835, %s851
          %s853 = smul.addr %s28, 4
          %s854 = sadd.s32 %s29, %s853
          %s855 = smul.addr %s854, 32
          %s856 = scalar_lea.hbm %s5, %s855
          %s858 = sshll.u32 %s838, 4
          %s859 = int_to_ptr.vmem [resolvable:$true] %s858
          %861 = dma.vmem_to_hbm [thread:$0]  %s859, 32, %s856, %s835
        $region122: #{conv3d_pallas.1} parent=31 // pred_fallthru
          _
        // Predicated region
        $region123: #{conv3d_pallas.1} parent=31 // pred_check
          %p862 = pneg %p180
        $region124: #{conv3d_pallas.1} parent=31 // pred_check_branch
          %864 = sbr.rel (%p862) target = $region126
        $region125: #{conv3d_pallas.1} parent=31 // pred_region
          %s866 = ssub.s32 32, 32
          %867 = vsyncadd %s840, %s866
          %s868 = smul.addr %s28, 4
          %s869 = sadd.s32 %s29, %s868
          %s870 = smul.addr %s869, 32
          %s871 = scalar_lea.hbm %s6, %s870
          %s873 = sshll.u32 %s843, 4
          %s874 = int_to_ptr.vmem [resolvable:$true] %s873
          %876 = dma.vmem_to_hbm [thread:$0]  %s874, 32, %s871, %s840
        $region126: #{conv3d_pallas.1} parent=31 // pred_fallthru
          _
      $region32: #{conv3d_pallas.1} parent=5 // pred_fallthru
        _
      %p877 = scmp.le.s32.totalorder 2, %s19
      // Predicated region
      $region127: #{conv3d_pallas.1} parent=5 // pred_check
        %p878 = pneg %p877
      $region128: #{conv3d_pallas.1} parent=5 // pred_check_branch
        %880 = sbr.rel (%p878) target = $region130
      $region129: #{conv3d_pallas.1} parent=5 // pred_region
        %s881 = ssub.s32 %s19, 2
        // Predicated region
        $region131: #{conv3d_pallas.1} parent=129 // pred_check
          %p882 = pneg %p130
        $region132: #{conv3d_pallas.1} parent=129 // pred_check_branch
          %884 = sbr.rel (%p882) target = $region134
        $region133: #{conv3d_pallas.1} parent=129 // pred_region
          %p885 = scmp.lt.s32.totalorder %s30, 1
          %s886 = scalar_select %p885, %s30, 1
          %p887 = scmp.lt.s32.totalorder %s31, 3
          %s888 = scalar_select %p887, %s31, 3
          %s889 = smul.addr %s886, 4
          %s890 = sadd.s32 %s888, %s889
          %s891 = smul.addr %s890, 2
          %s892 = scalar_lea.vmem %s4, %s891
        $region134: #{conv3d_pallas.1} parent=129 // pred_fallthru
          _
        // Predicated region
        $region135: #{conv3d_pallas.1} parent=129 // pred_check
          %p893 = pneg %p158
        $region136: #{conv3d_pallas.1} parent=129 // pred_check_branch
          %895 = sbr.rel (%p893) target = $region138
        $region137: #{conv3d_pallas.1} parent=129 // pred_region
          %s896 = sand.u32 %s143, 1
          %s897 = scalar_lea.sflag [#allocation6], %s896
          %s898 = sand.u32 %s143, 1
          %s899 = smul.addr %s898, 2
          %s900 = scalar_lea.vmem [#allocation5], %s899
          %901 = dma.done %s897, 32
        $region138: #{conv3d_pallas.1} parent=129 // pred_fallthru
          _
        // Predicated region
        $region139: #{conv3d_pallas.1} parent=129 // pred_check
          %p902 = pneg %p186
        $region140: #{conv3d_pallas.1} parent=129 // pred_check_branch
          %904 = sbr.rel (%p902) target = $region142
        $region141: #{conv3d_pallas.1} parent=129 // pred_region
          %s905 = sand.u32 %s171, 1
          %s906 = scalar_lea.sflag [#allocation8], %s905
          %s907 = sand.u32 %s171, 1
          %s908 = smul.addr %s907, 2
          %s909 = scalar_lea.vmem [#allocation7], %s908
          %910 = dma.done %s906, 32
        $region142: #{conv3d_pallas.1} parent=129 // pred_fallthru
          _
      $region130: #{conv3d_pallas.1} parent=5 // pred_fallthru
        _
    $region6: #{conv3d_pallas.1} parent=1 // loop_footer
      %s23 = sadd.s32 1, %s19
    $region7: #{conv3d_pallas.1} parent=1 // loop_footer_branch
      %18 = sbr.rel target = $region3
    $region8: #{conv3d_pallas.1} parent=1 // loop_exit
      _
    %911 = vsyncpa [#allocation6], 1
    %s912 = scalar_lea.sflag [#allocation6], 1
    %913 = vsyncpa %s912, 1
    %914 = vsyncpa [#allocation8], 1
    %s915 = scalar_lea.sflag [#allocation8], 1
    %916 = vsyncpa %s915, 1
  %917 = vsyncmov [#allocation4]
  %s918 = vpop.sfrf %917
  %p919 = scmp.eq.s32.totalorder %s918, 0
  %p920 = pneg %p919
  %922 = shalt.err (%p920)
  %s923 = scalar_lea.sflag [#allocation4], 1
  %924 = vsyncmov %s923
  %s925 = vpop.sfrf %924
  %p926 = scmp.eq.s32.totalorder %s925, 0
  %p927 = pneg %p926
  %929 = shalt.err (%p927)

</llo_original>
